<compile_context>
chip_gen: v7x
topology: tpu7x:2x2x1
jax: 0.10.0
libtpu: 0.0.40
codegen_flags: <defaults>
</compile_context>

<pallas_src>
import functools

import jax
import jax.numpy as jnp
import numpy as np
from jax.experimental import pallas as pl
from jax.experimental.pallas import tpu as pltpu


def _band_matrices(n):
    """1-D band matrices encoding the HILL pipeline along one axis of length n.

    A   (n+2, n): replicate-pad-by-2 + valid 3-tap [1,-2,1] filter.
    P3  (n, n+2): valid 3-tap box sum (avepool1 interior, unscaled).
    P15 (n, n)  : replicate-pad-by-7 + valid 15-tap box sum (avepool2, unscaled).
    All entries are small integers -> exactly representable in bf16.
    """
    taps = (1.0, -2.0, 1.0)
    A = np.zeros((n + 2, n), np.float32)
    for i in range(n + 2):
        for d, w in enumerate(taps):
            A[i, min(max(i + d - 2, 0), n - 1)] += w
    P3 = np.zeros((n, n + 2), np.float32)
    for i in range(n):
        P3[i, i:i + 3] = 1.0
    P15 = np.zeros((n, n), np.float32)
    for i in range(n):
        for d in range(-7, 8):
            P15[i, min(max(i + d, 0), n - 1)] += 1.0
    return A, P3, P15


@functools.lru_cache(maxsize=None)
def _hill_constants(img_size, G):
    """Left band matrices + block-diagonal (lane-packed) right matrices (numpy)."""
    A, P3, P15 = _band_matrices(img_size)
    eye = np.eye(G, dtype=np.float32)
    ATb = np.kron(eye, A.T)        # (G*W,      G*(W+2))
    P3Tb = np.kron(eye, P3.T)      # (G*(W+2),  G*W)
    P15Tb = np.kron(eye, P15.T)    # (G*W,      G*W)
    return A, P3, P15, ATb, P3Tb, P15Tb


def _plan(N, img_size):
    """Static packing plan: (G planes per lane-slab, Bt slabs per grid step, NBp slabs)."""
    W = img_size
    # Lane-dense packing: pack G planes side by side so the last dim is >= 128.
    # (Kept at 128 rather than 256 so the kron(I_G, .) right-matmul inflation
    #  stays bounded and v5e's 128-wide MXU is still fully used.)
    G = 1 if W >= 128 else -(-128 // W)
    NB0 = -(-N // G)                      # slabs needed (batch padded with zeros)
    if img_size <= 64:
        # Tiny planes: amortize per-grid-step overhead by doing Bt slabs per step,
        # but keep >= 2 grid steps whenever NB0 >= 2 (v7x has 2 TensorCores).
        cap = max(1, 128 // img_size)
        Bt = max(1, min(cap, NB0 // 2))
    else:
        Bt = 1
    NBp = -(-NB0 // Bt) * Bt              # slabs, padded to a multiple of Bt
    return G, Bt, NBp


def _split3(x):
    """x (f32) = x0 + x1 + x2 with each term exactly representable in bf16."""
    x0 = x.astype(jnp.bfloat16)
    r = x - x0.astype(jnp.float32)
    x1 = r.astype(jnp.bfloat16)
    x2 = (r - x1.astype(jnp.float32)).astype(jnp.bfloat16)
    return x0, x1, x2


def _mm_left(m_bf16, x_f32):
    """m @ x with ~f32 accuracy using 3 single-pass bf16 MXU dots (m exact in bf16)."""
    x0, x1, x2 = _split3(x_f32)
    acc = jnp.dot(m_bf16, x0, preferred_element_type=jnp.float32)
    acc = acc + jnp.dot(m_bf16, x1, preferred_element_type=jnp.float32)
    acc = acc + jnp.dot(m_bf16, x2, preferred_element_type=jnp.float32)
    return acc


def _mm_right(x_f32, m_bf16):
    """x @ m with ~f32 accuracy using 3 single-pass bf16 MXU dots (m exact in bf16)."""
    x0, x1, x2 = _split3(x_f32)
    acc = jnp.dot(x0, m_bf16, preferred_element_type=jnp.float32)
    acc = acc + jnp.dot(x1, m_bf16, preferred_element_type=jnp.float32)
    acc = acc + jnp.dot(x2, m_bf16, preferred_element_type=jnp.float32)
    return acc


def hill_kernel(x_ref, a_ref, p3_ref, p15_ref, atb_ref, p3tb_ref, p15tb_ref,
                out_ref, *, eps, bt):
    """One grid step: Bt slabs, each an (H, G*W) pack of G lane-packed planes."""
    for i in range(bt):                      # static unroll over slabs in this step
        x = x_ref[i]                                           # (H, G*W) f32
        # conv1 (+ effective replicate-pad-2), then |.|   -> (H+2, G*(W+2))
        t = jnp.abs(_mm_right(_mm_left(a_ref[...], x), atb_ref[...]))
        # avepool1 interior as an UNSCALED 3x3 box sum    -> (H, G*W)
        s = _mm_right(_mm_left(p3_ref[...], t), p3tb_ref[...])
        # t4 = 1/(s/9 + eps) = 1/(s + 9*eps) scaled by 9 (scale deferred below).
        r = 1.0 / (s + 9.0 * eps)
        # ReplicationPad2d(7) + 15x15 box sum; apply 9/225 scale exactly in f32.
        o = _mm_right(_mm_left(p15_ref[...], r), p15tb_ref[...])
        out_ref[i] = o * (9.0 / 225.0)


@functools.partial(jax.jit, static_argnames=("img_size", "eps"))
def hill_pallas(x, *, img_size, eps=1e-10):
    """HILL forward: x (N, 1, img_size, img_size) f32 -> same shape."""
    N = x.shape[0]
    assert x.shape[1] == 1 and x.shape[2] == img_size and x.shape[3] == img_size
    H = W = img_size
    G, Bt, NBp = _plan(N, img_size)
    Np = NBp * G                              # padded batch size

    xs = x[:, 0, :, :].astype(jnp.float32)                        # (N, H, W)
    if Np > N:
        # Zero-pad extra planes: 1/(0 + eps) is finite, results are sliced off.
        xs = jnp.pad(xs, ((0, Np - N), (0, 0), (0, 0)))
    # Lane-pack G planes side by side along the last axis (layout plumbing only).
    xp = xs.reshape(NBp, G, H, W).transpose(0, 2, 1, 3).reshape(NBp, H, G * W)

    # Compile-time constants (cached numpy), stored in bf16 (entries are exact).
    A, P3, P15, ATb, P3Tb, P15Tb = _hill_constants(img_size, G)
    cast = lambda m: jnp.asarray(m, dtype=jnp.bfloat16)
    A_c, P3_c, P15_c = cast(A), cast(P3), cast(P15)
    ATb_c, P3Tb_c, P15Tb_c = cast(ATb), cast(P3Tb), cast(P15Tb)

    const2 = lambda b: (0, 0)                 # band matrices: fetched once, resident
    slab = lambda b: (b, 0, 0)

    cp_kwargs = dict(dimension_semantics=("parallel",))
    if img_size >= 512:
        # Dense band constants + double-buffered slabs get large; raise scoped VMEM.
        # TODO(synk): row-tiled banded matrices (9-row halo) for img_size >= 1024.
        cp_kwargs["vmem_limit_bytes"] = 64 * 1024 * 1024

    kernel = functools.partial(hill_kernel, eps=eps, bt=Bt)
    out = pl.pallas_call(
        kernel,
        out_shape=jax.ShapeDtypeStruct((NBp, H, G * W), jnp.float32),
        grid=(NBp // Bt,),
        in_specs=[
            pl.BlockSpec((Bt, H, G * W), slab),   # packed planes (lane-dense)
            pl.BlockSpec(A_c.shape, const2),
            pl.BlockSpec(P3_c.shape, const2),
            pl.BlockSpec(P15_c.shape, const2),
            pl.BlockSpec(ATb_c.shape, const2),
            pl.BlockSpec(P3Tb_c.shape, const2),
            pl.BlockSpec(P15Tb_c.shape, const2),
        ],
        out_specs=pl.BlockSpec((Bt, H, G * W), slab),
        compiler_params=pltpu.CompilerParams(**cp_kwargs),
    )(xp, A_c, P3_c, P15_c, ATb_c, P3Tb_c, P15Tb_c)

    # Unpack lanes back to planes, drop batch padding, restore channel dim.
    out = out.reshape(NBp, H, G, W).transpose(0, 2, 1, 3).reshape(Np, H, W)
    return out[:N, None, :, :]


def hill_reference(x, img_size, eps=1e-10):
    """Pure-JAX reference mirroring the PyTorch forward exactly."""
    t1 = jnp.pad(x, ((0, 0), (0, 0), (3, 3), (3, 3)), mode="edge")
    w = jnp.array([[-1., 2., -1.], [2., -4., 2.], [-1., 2., -1.]],
                  jnp.float32).reshape(1, 1, 3, 3)
    t2 = jax.lax.conv_general_dilated(
        t1, w, window_strides=(1, 1), padding=((1, 1), (1, 1)),
        dimension_numbers=("NCHW", "OIHW", "NCHW"),
        precision=jax.lax.Precision.HIGHEST)
    a = jnp.abs(t2)
    s = jax.lax.reduce_window(
        a, 0.0, jax.lax.add, (1, 1, 3, 3), (1, 1, 1, 1),
        padding=((0, 0), (0, 0), (1, 1), (1, 1)))
    t3 = s / 9.0
    t4 = 1.0 / (t3[:, :, 3:img_size + 3, 3:img_size + 3] + eps)
    t4p = jnp.pad(t4, ((0, 0), (0, 0), (7, 7), (7, 7)), mode="edge")
    s2 = jax.lax.reduce_window(
        t4p, 0.0, jax.lax.add, (1, 1, 15, 15), (1, 1, 1, 1), padding="VALID")
    return s2 / 225.0


if __name__ == "__main__":
    key = jax.random.PRNGKey(0)
    # (N=2,  img=16): lane packing G=8 with batch zero-padding, single grid step.
    # (N=16, img=32): Bt=2 slabs per grid step (unrolled), 2 grid steps.
    # (N=3,  img=64): G=2 packing with padding, 2 grid steps (both v7x TCs busy).
    for (n, img) in ((2, 16), (16, 32), (3, 64)):
        k, key = jax.random.split(key)
        x = jax.random.normal(k, (n, 1, img, img), dtype=jnp.float32)

        out = jax.block_until_ready(hill_pallas(x, img_size=img))
        ref = hill_reference(x, img)

        assert out.shape == (n, 1, img, img)
        err = jnp.max(jnp.abs(out - ref))
        assert jnp.allclose(out, ref, rtol=1e-4, atol=1e-5), (
            f"mismatch at N={n}, img={img}: max abs err {err}")
    print("KERNEL_OK")
</pallas_src>

<mosaic_0001>
module attributes {stable_mosaic.version = 11 : i64} {
  func.func @hill_kernel(%arg0: i32, %arg1: memref<1x16x128xf32, #tpu.memory_space<vmem>>, %arg2: memref<18x16xbf16, #tpu.memory_space<vmem>>, %arg3: memref<16x18xbf16, #tpu.memory_space<vmem>>, %arg4: memref<16x16xbf16, #tpu.memory_space<vmem>>, %arg5: memref<128x144xbf16, #tpu.memory_space<vmem>>, %arg6: memref<144x128xbf16, #tpu.memory_space<vmem>>, %arg7: memref<128x128xbf16, #tpu.memory_space<vmem>>, %arg8: memref<1x16x128xf32, #tpu.memory_space<vmem>>) attributes {dimension_semantics = [#tpu.dimension_semantics<parallel>], iteration_bounds = array<i64: 1>, scalar_prefetch = 0 : i64, scratch_operands = 0 : i64, tpu.core_type = #tpu.core_type<tc>, window_params = [{transform_indices = @transform_0, window_bounds = array<i64: 1, 16, 128>}, {pipeline_mode = #tpu.pipeline_mode<synchronous>, transform_indices = @transform_1, window_bounds = array<i64: 18, 16>}, {pipeline_mode = #tpu.pipeline_mode<synchronous>, transform_indices = @transform_2, window_bounds = array<i64: 16, 18>}, {pipeline_mode = #tpu.pipeline_mode<synchronous>, transform_indices = @transform_3, window_bounds = array<i64: 16, 16>}, {pipeline_mode = #tpu.pipeline_mode<synchronous>, transform_indices = @transform_4, window_bounds = array<i64: 128, 144>}, {pipeline_mode = #tpu.pipeline_mode<synchronous>, transform_indices = @transform_5, window_bounds = array<i64: 144, 128>}, {pipeline_mode = #tpu.pipeline_mode<synchronous>, transform_indices = @transform_6, window_bounds = array<i64: 128, 128>}, {transform_indices = @transform_7, window_bounds = array<i64: 1, 16, 128>}]} {
    %c0 = arith.constant 0 : index
    %c0_0 = arith.constant 0 : index
    %c0_1 = arith.constant 0 : index
    %0 = vector.load %arg1[%c0, %c0_0, %c0_1] : memref<1x16x128xf32, #tpu.memory_space<vmem>>, vector<1x16x128xf32>
    %1 = vector.shape_cast %0 : vector<1x16x128xf32> to vector<16x128xf32>
    %c0_2 = arith.constant 0 : index
    %c0_3 = arith.constant 0 : index
    %2 = vector.load %arg2[%c0_2, %c0_3] : memref<18x16xbf16, #tpu.memory_space<vmem>>, vector<18x16xbf16>
    %3 = arith.truncf %1 : vector<16x128xf32> to vector<16x128xbf16>
    %4 = arith.extf %3 : vector<16x128xbf16> to vector<16x128xf32>
    %5 = arith.subf %1, %4 : vector<16x128xf32>
    %6 = arith.truncf %5 : vector<16x128xf32> to vector<16x128xbf16>
    %7 = arith.extf %6 : vector<16x128xbf16> to vector<16x128xf32>
    %8 = arith.subf %5, %7 : vector<16x128xf32>
    %9 = arith.truncf %8 : vector<16x128xf32> to vector<16x128xbf16>
    %cst = arith.constant dense<0.000000e+00> : vector<18x128xf32>
    %10 = tpu.matmul %2, %3, %cst {dimension_numbers = #tpu.dot_dimension_numbers<[1], [0], [0], [1], [0, 0, 1, 1], [], []>} : vector<18x16xbf16>, vector<16x128xbf16>, vector<18x128xf32> -> vector<18x128xf32>
    %cst_4 = arith.constant dense<0.000000e+00> : vector<18x128xf32>
    %11 = tpu.matmul %2, %6, %cst_4 {dimension_numbers = #tpu.dot_dimension_numbers<[1], [0], [0], [1], [0, 0, 1, 1], [], []>} : vector<18x16xbf16>, vector<16x128xbf16>, vector<18x128xf32> -> vector<18x128xf32>
    %12 = arith.addf %10, %11 : vector<18x128xf32>
    %cst_5 = arith.constant dense<0.000000e+00> : vector<18x128xf32>
    %13 = tpu.matmul %2, %9, %cst_5 {dimension_numbers = #tpu.dot_dimension_numbers<[1], [0], [0], [1], [0, 0, 1, 1], [], []>} : vector<18x16xbf16>, vector<16x128xbf16>, vector<18x128xf32> -> vector<18x128xf32>
    %14 = arith.addf %12, %13 : vector<18x128xf32>
    %c0_6 = arith.constant 0 : index
    %c0_7 = arith.constant 0 : index
    %15 = vector.load %arg5[%c0_6, %c0_7] : memref<128x144xbf16, #tpu.memory_space<vmem>>, vector<128x144xbf16>
    %16 = arith.truncf %14 : vector<18x128xf32> to vector<18x128xbf16>
    %17 = arith.extf %16 : vector<18x128xbf16> to vector<18x128xf32>
    %18 = arith.subf %14, %17 : vector<18x128xf32>
    %19 = arith.truncf %18 : vector<18x128xf32> to vector<18x128xbf16>
    %20 = arith.extf %19 : vector<18x128xbf16> to vector<18x128xf32>
    %21 = arith.subf %18, %20 : vector<18x128xf32>
    %22 = arith.truncf %21 : vector<18x128xf32> to vector<18x128xbf16>
    %cst_8 = arith.constant dense<0.000000e+00> : vector<18x144xf32>
    %23 = tpu.matmul %16, %15, %cst_8 {dimension_numbers = #tpu.dot_dimension_numbers<[1], [0], [0], [1], [0, 0, 1, 1], [], []>} : vector<18x128xbf16>, vector<128x144xbf16>, vector<18x144xf32> -> vector<18x144xf32>
    %cst_9 = arith.constant dense<0.000000e+00> : vector<18x144xf32>
    %24 = tpu.matmul %19, %15, %cst_9 {dimension_numbers = #tpu.dot_dimension_numbers<[1], [0], [0], [1], [0, 0, 1, 1], [], []>} : vector<18x128xbf16>, vector<128x144xbf16>, vector<18x144xf32> -> vector<18x144xf32>
    %25 = arith.addf %23, %24 : vector<18x144xf32>
    %cst_10 = arith.constant dense<0.000000e+00> : vector<18x144xf32>
    %26 = tpu.matmul %22, %15, %cst_10 {dimension_numbers = #tpu.dot_dimension_numbers<[1], [0], [0], [1], [0, 0, 1, 1], [], []>} : vector<18x128xbf16>, vector<128x144xbf16>, vector<18x144xf32> -> vector<18x144xf32>
    %27 = arith.addf %25, %26 : vector<18x144xf32>
    %28 = math.absf %27 : vector<18x144xf32>
    %c0_11 = arith.constant 0 : index
    %c0_12 = arith.constant 0 : index
    %29 = vector.load %arg3[%c0_11, %c0_12] : memref<16x18xbf16, #tpu.memory_space<vmem>>, vector<16x18xbf16>
    %30 = arith.truncf %28 : vector<18x144xf32> to vector<18x144xbf16>
    %31 = arith.extf %30 : vector<18x144xbf16> to vector<18x144xf32>
    %32 = arith.subf %28, %31 : vector<18x144xf32>
    %33 = arith.truncf %32 : vector<18x144xf32> to vector<18x144xbf16>
    %34 = arith.extf %33 : vector<18x144xbf16> to vector<18x144xf32>
    %35 = arith.subf %32, %34 : vector<18x144xf32>
    %36 = arith.truncf %35 : vector<18x144xf32> to vector<18x144xbf16>
    %cst_13 = arith.constant dense<0.000000e+00> : vector<16x144xf32>
    %37 = tpu.matmul %29, %30, %cst_13 {dimension_numbers = #tpu.dot_dimension_numbers<[1], [0], [0], [1], [0, 0, 1, 1], [], []>} : vector<16x18xbf16>, vector<18x144xbf16>, vector<16x144xf32> -> vector<16x144xf32>
    %cst_14 = arith.constant dense<0.000000e+00> : vector<16x144xf32>
    %38 = tpu.matmul %29, %33, %cst_14 {dimension_numbers = #tpu.dot_dimension_numbers<[1], [0], [0], [1], [0, 0, 1, 1], [], []>} : vector<16x18xbf16>, vector<18x144xbf16>, vector<16x144xf32> -> vector<16x144xf32>
    %39 = arith.addf %37, %38 : vector<16x144xf32>
    %cst_15 = arith.constant dense<0.000000e+00> : vector<16x144xf32>
    %40 = tpu.matmul %29, %36, %cst_15 {dimension_numbers = #tpu.dot_dimension_numbers<[1], [0], [0], [1], [0, 0, 1, 1], [], []>} : vector<16x18xbf16>, vector<18x144xbf16>, vector<16x144xf32> -> vector<16x144xf32>
    %41 = arith.addf %39, %40 : vector<16x144xf32>
    %c0_16 = arith.constant 0 : index
    %c0_17 = arith.constant 0 : index
    %42 = vector.load %arg6[%c0_16, %c0_17] : memref<144x128xbf16, #tpu.memory_space<vmem>>, vector<144x128xbf16>
    %43 = arith.truncf %41 : vector<16x144xf32> to vector<16x144xbf16>
    %44 = arith.extf %43 : vector<16x144xbf16> to vector<16x144xf32>
    %45 = arith.subf %41, %44 : vector<16x144xf32>
    %46 = arith.truncf %45 : vector<16x144xf32> to vector<16x144xbf16>
    %47 = arith.extf %46 : vector<16x144xbf16> to vector<16x144xf32>
    %48 = arith.subf %45, %47 : vector<16x144xf32>
    %49 = arith.truncf %48 : vector<16x144xf32> to vector<16x144xbf16>
    %cst_18 = arith.constant dense<0.000000e+00> : vector<16x128xf32>
    %50 = tpu.matmul %43, %42, %cst_18 {dimension_numbers = #tpu.dot_dimension_numbers<[1], [0], [0], [1], [0, 0, 1, 1], [], []>} : vector<16x144xbf16>, vector<144x128xbf16>, vector<16x128xf32> -> vector<16x128xf32>
    %cst_19 = arith.constant dense<0.000000e+00> : vector<16x128xf32>
    %51 = tpu.matmul %46, %42, %cst_19 {dimension_numbers = #tpu.dot_dimension_numbers<[1], [0], [0], [1], [0, 0, 1, 1], [], []>} : vector<16x144xbf16>, vector<144x128xbf16>, vector<16x128xf32> -> vector<16x128xf32>
    %52 = arith.addf %50, %51 : vector<16x128xf32>
    %cst_20 = arith.constant dense<0.000000e+00> : vector<16x128xf32>
    %53 = tpu.matmul %49, %42, %cst_20 {dimension_numbers = #tpu.dot_dimension_numbers<[1], [0], [0], [1], [0, 0, 1, 1], [], []>} : vector<16x144xbf16>, vector<144x128xbf16>, vector<16x128xf32> -> vector<16x128xf32>
    %54 = arith.addf %52, %53 : vector<16x128xf32>
    %cst_21 = arith.constant 9.000000e-10 : f32
    %55 = vector.broadcast %cst_21 : f32 to vector<16x128xf32>
    %56 = arith.addf %54, %55 : vector<16x128xf32>
    %cst_22 = arith.constant 1.000000e+00 : f32
    %57 = vector.broadcast %cst_22 : f32 to vector<16x128xf32>
    %58 = arith.divf %57, %56 : vector<16x128xf32>
    %c0_23 = arith.constant 0 : index
    %c0_24 = arith.constant 0 : index
    %59 = vector.load %arg4[%c0_23, %c0_24] : memref<16x16xbf16, #tpu.memory_space<vmem>>, vector<16x16xbf16>
    %60 = arith.truncf %58 : vector<16x128xf32> to vector<16x128xbf16>
    %61 = arith.extf %60 : vector<16x128xbf16> to vector<16x128xf32>
    %62 = arith.subf %58, %61 : vector<16x128xf32>
    %63 = arith.truncf %62 : vector<16x128xf32> to vector<16x128xbf16>
    %64 = arith.extf %63 : vector<16x128xbf16> to vector<16x128xf32>
    %65 = arith.subf %62, %64 : vector<16x128xf32>
    %66 = arith.truncf %65 : vector<16x128xf32> to vector<16x128xbf16>
    %cst_25 = arith.constant dense<0.000000e+00> : vector<16x128xf32>
    %67 = tpu.matmul %59, %60, %cst_25 {dimension_numbers = #tpu.dot_dimension_numbers<[1], [0], [0], [1], [0, 0, 1, 1], [], []>} : vector<16x16xbf16>, vector<16x128xbf16>, vector<16x128xf32> -> vector<16x128xf32>
    %cst_26 = arith.constant dense<0.000000e+00> : vector<16x128xf32>
    %68 = tpu.matmul %59, %63, %cst_26 {dimension_numbers = #tpu.dot_dimension_numbers<[1], [0], [0], [1], [0, 0, 1, 1], [], []>} : vector<16x16xbf16>, vector<16x128xbf16>, vector<16x128xf32> -> vector<16x128xf32>
    %69 = arith.addf %67, %68 : vector<16x128xf32>
    %cst_27 = arith.constant dense<0.000000e+00> : vector<16x128xf32>
    %70 = tpu.matmul %59, %66, %cst_27 {dimension_numbers = #tpu.dot_dimension_numbers<[1], [0], [0], [1], [0, 0, 1, 1], [], []>} : vector<16x16xbf16>, vector<16x128xbf16>, vector<16x128xf32> -> vector<16x128xf32>
    %71 = arith.addf %69, %70 : vector<16x128xf32>
    %c0_28 = arith.constant 0 : index
    %c0_29 = arith.constant 0 : index
    %72 = vector.load %arg7[%c0_28, %c0_29] : memref<128x128xbf16, #tpu.memory_space<vmem>>, vector<128x128xbf16>
    %73 = arith.truncf %71 : vector<16x128xf32> to vector<16x128xbf16>
    %74 = arith.extf %73 : vector<16x128xbf16> to vector<16x128xf32>
    %75 = arith.subf %71, %74 : vector<16x128xf32>
    %76 = arith.truncf %75 : vector<16x128xf32> to vector<16x128xbf16>
    %77 = arith.extf %76 : vector<16x128xbf16> to vector<16x128xf32>
    %78 = arith.subf %75, %77 : vector<16x128xf32>
    %79 = arith.truncf %78 : vector<16x128xf32> to vector<16x128xbf16>
    %cst_30 = arith.constant dense<0.000000e+00> : vector<16x128xf32>
    %80 = tpu.matmul %73, %72, %cst_30 {dimension_numbers = #tpu.dot_dimension_numbers<[1], [0], [0], [1], [0, 0, 1, 1], [], []>} : vector<16x128xbf16>, vector<128x128xbf16>, vector<16x128xf32> -> vector<16x128xf32>
    %cst_31 = arith.constant dense<0.000000e+00> : vector<16x128xf32>
    %81 = tpu.matmul %76, %72, %cst_31 {dimension_numbers = #tpu.dot_dimension_numbers<[1], [0], [0], [1], [0, 0, 1, 1], [], []>} : vector<16x128xbf16>, vector<128x128xbf16>, vector<16x128xf32> -> vector<16x128xf32>
    %82 = arith.addf %80, %81 : vector<16x128xf32>
    %cst_32 = arith.constant dense<0.000000e+00> : vector<16x128xf32>
    %83 = tpu.matmul %79, %72, %cst_32 {dimension_numbers = #tpu.dot_dimension_numbers<[1], [0], [0], [1], [0, 0, 1, 1], [], []>} : vector<16x128xbf16>, vector<128x128xbf16>, vector<16x128xf32> -> vector<16x128xf32>
    %84 = arith.addf %82, %83 : vector<16x128xf32>
    %cst_33 = arith.constant 4.000000e-02 : f32
    %85 = vector.broadcast %cst_33 : f32 to vector<16x128xf32>
    %86 = arith.mulf %84, %85 : vector<16x128xf32>
    %c0_34 = arith.constant 0 : index
    %c0_35 = arith.constant 0 : index
    %c0_36 = arith.constant 0 : index
    %87 = vector.load %arg8[%c0_34, %c0_35, %c0_36] : memref<1x16x128xf32, #tpu.memory_space<vmem>>, vector<1x16x128xf32>
    %88 = vector.shape_cast %87 : vector<1x16x128xf32> to vector<16x128xf32>
    %89 = vector.shape_cast %86 : vector<16x128xf32> to vector<1x16x128xf32>
    tpu.vector_store %arg8[%c0_34, %c0_35, %c0_36], %89 {strides = array<i32>} : memref<1x16x128xf32, #tpu.memory_space<vmem>>, vector<1x16x128xf32>,
    return
  }
  func.func @transform_0(%arg0: i32) -> (i32, i32, i32) {
    %c0_i32 = arith.constant 0 : i32
    %c0_i32_0 = arith.constant 0 : i32
    %c0_i32_1 = arith.constant 0 : i32
    return %arg0, %c0_i32, %c0_i32_0 : i32, i32, i32
  }
  func.func @transform_1(%arg0: i32) -> (i32, i32) {
    %c0_i32 = arith.constant 0 : i32
    %c0_i32_0 = arith.constant 0 : i32
    %c0_i32_1 = arith.constant 0 : i32
    return %c0_i32, %c0_i32_0 : i32, i32
  }
  func.func @transform_2(%arg0: i32) -> (i32, i32) {
    %c0_i32 = arith.constant 0 : i32
    %c0_i32_0 = arith.constant 0 : i32
    %c0_i32_1 = arith.constant 0 : i32
    return %c0_i32, %c0_i32_0 : i32, i32
  }
  func.func @transform_3(%arg0: i32) -> (i32, i32) {
    %c0_i32 = arith.constant 0 : i32
    %c0_i32_0 = arith.constant 0 : i32
    %c0_i32_1 = arith.constant 0 : i32
    return %c0_i32, %c0_i32_0 : i32, i32
  }
  func.func @transform_4(%arg0: i32) -> (i32, i32) {
    %c0_i32 = arith.constant 0 : i32
    %c0_i32_0 = arith.constant 0 : i32
    %c0_i32_1 = arith.constant 0 : i32
    return %c0_i32, %c0_i32_0 : i32, i32
  }
  func.func @transform_5(%arg0: i32) -> (i32, i32) {
    %c0_i32 = arith.constant 0 : i32
    %c0_i32_0 = arith.constant 0 : i32
    %c0_i32_1 = arith.constant 0 : i32
    return %c0_i32, %c0_i32_0 : i32, i32
  }
  func.func @transform_6(%arg0: i32) -> (i32, i32) {
    %c0_i32 = arith.constant 0 : i32
    %c0_i32_0 = arith.constant 0 : i32
    %c0_i32_1 = arith.constant 0 : i32
    return %c0_i32, %c0_i32_0 : i32, i32
  }
  func.func @transform_7(%arg0: i32) -> (i32, i32, i32) {
    %c0_i32 = arith.constant 0 : i32
    %c0_i32_0 = arith.constant 0 : i32
    %c0_i32_1 = arith.constant 0 : i32
    return %arg0, %c0_i32, %c0_i32_0 : i32, i32, i32
  }
}

</mosaic_0001>

<llo_original>
// kernel: hill_pallas.1
$region0: #{hill_pallas.1}
  #allocation0 [shape = 'u32[]', space=smem, size = 0x4, offset = 0x4, fixed_abs, tag = 'smem constant byte address 0x4 - core index']
  #allocation1 [shape = 'u32[144,128]{1,0:T(1,128)}', space=vmem, size = 0x12000, scoped, tag = 'internal scratch']
  %s0 = inlined_call_operand.vmem [shape: f32[1,16,128], index: 0, kind: input, shape index: {}]
  %s1 = inlined_call_operand.vmem [shape: bf16[18,16], index: 1, kind: input, shape index: {}]
  %s2 = inlined_call_operand.vmem [shape: bf16[16,18], index: 2, kind: input, shape index: {}]
  %s3 = inlined_call_operand.vmem [shape: bf16[16,16], index: 3, kind: input, shape index: {}]
  %s4 = inlined_call_operand.vmem [shape: bf16[128,144], index: 4, kind: input, shape index: {}]
  %s5 = inlined_call_operand.vmem [shape: bf16[144,128], index: 5, kind: input, shape index: {}]
  %s6 = inlined_call_operand.vmem [shape: bf16[128,128], index: 6, kind: input, shape index: {}]
  %s7 = inlined_call_operand.vmem [shape: f32[1,16,128], index: 7, kind: output, shape index: {}]
  %s8 = sld [smem:[#allocation0]]
  $region38: #{hill_pallas.1} parent=0
    _
  %s10 = ssub.s32 1, %s8
  %s11 = scalar_select 0, %s10, %s8
  // Predicated region
  $region2: #{hill_pallas.1} parent=0 // pred_check
    _
  $region3: #{hill_pallas.1} parent=0 // pred_check_branch
    %13 = sbr.rel (0) target = $region5
  $region4: #{hill_pallas.1} parent=0 // pred_region
    _
  $region5: #{hill_pallas.1} parent=0 // pred_fallthru
    _
  // Predicated region
  $region6: #{hill_pallas.1} parent=0 // pred_check
    _
  $region7: #{hill_pallas.1} parent=0 // pred_check_branch
    %15 = sbr.rel (0) target = $region9
  $region8: #{hill_pallas.1} parent=0 // pred_region
    _
  $region9: #{hill_pallas.1} parent=0 // pred_fallthru
    _
  // Predicated region
  $region10: #{hill_pallas.1} parent=0 // pred_check
    _
  $region11: #{hill_pallas.1} parent=0 // pred_check_branch
    %17 = sbr.rel (0) target = $region13
  $region12: #{hill_pallas.1} parent=0 // pred_region
    _
  $region13: #{hill_pallas.1} parent=0 // pred_fallthru
    _
  // Predicated region
  $region14: #{hill_pallas.1} parent=0 // pred_check
    _
  $region15: #{hill_pallas.1} parent=0 // pred_check_branch
    %19 = sbr.rel (0) target = $region17
  $region16: #{hill_pallas.1} parent=0 // pred_region
    _
  $region17: #{hill_pallas.1} parent=0 // pred_fallthru
    _
  // Predicated region
  $region18: #{hill_pallas.1} parent=0 // pred_check
    _
  $region19: #{hill_pallas.1} parent=0 // pred_check_branch
    %21 = sbr.rel (0) target = $region21
  $region20: #{hill_pallas.1} parent=0 // pred_region
    _
  $region21: #{hill_pallas.1} parent=0 // pred_fallthru
    _
  // Predicated region
  $region22: #{hill_pallas.1} parent=0 // pred_check
    _
  $region23: #{hill_pallas.1} parent=0 // pred_check_branch
    %23 = sbr.rel (0) target = $region25
  $region24: #{hill_pallas.1} parent=0 // pred_region
    _
  $region25: #{hill_pallas.1} parent=0 // pred_fallthru
    _
  // Predicated region
  $region26: #{hill_pallas.1} parent=0 // pred_check
    _
  $region27: #{hill_pallas.1} parent=0 // pred_check_branch
    %25 = sbr.rel (0) target = $region29
  $region28: #{hill_pallas.1} parent=0 // pred_region
    _
  $region29: #{hill_pallas.1} parent=0 // pred_fallthru
    _
  %v27 = vld [vmem:[%s0] sm:$0xff]
  %v28 = vld [vmem:[%s0 + $0x8] sm:$0xff]
  %v29 = vld [vmem:[%s1] sm:$0xf]
  %v30 = vld [vmem:[%s1 + $0x4] sm:$0xf]
  %v31 = vld [vmem:[%s1 + $0x8] sm:$0x1]
  %v32 = vpack.c.bf16 %v28, %v27
  %v33 = vunpack.c.l.bf16 %v32
  %v34 = vunpack.c.h.bf16 %v32
  %v35 = vsub.f32 %v27, %v33
  %v36 = vsub.f32 %v28, %v34
  %v37 = vpack.c.bf16 %v36, %v35
  %v38 = vunpack.c.l.bf16 %v37
  %v39 = vunpack.c.h.bf16 %v37
  %v40 = vsub.f32 %v35, %v38
  %v41 = vsub.f32 %v36, %v39
  %v42 = vpack.c.bf16 %v41, %v40
  %v46 = vunpack.c.l.b16 %v29
  %v47 = vunpack.c.l.b16 %v30
  %v48 = vunpack.c.l.b16 %v31
  %v49 = vpack.c.b16 %v47, %v46
  %v50 = vpack.c.b16 %v48, %v48
  %vm51 = vcmask 130048
  %v53 = vsel %vm51, %v49, 0
  %v56 = vsel %vm51, %v50, 0
  %58 = vmatprep.subr.bf16.mxu0 0
  %59 = vmatpush1.bf16.msra.mxu0 %v37
  %60 = vmatprep.subr.bf16.mxu0 0
  %61 = vmatpush1.bf16.msra.mxu0 0
  %62 = vmatprep.subr.bf16.mxu0 0
  %63 = vmatpush1.bf16.msra.mxu0 0
  %64 = vmatprep.subr.bf16.mxu0 0
  %65 = vmatpush1.bf16.msra.mxu0 0
  %66 = vmatprep.subr.bf16.mxu0 0
  %67 = vmatpush1.bf16.msra.mxu0 0
  %68 = vmatprep.subr.bf16.mxu0 0
  %69 = vmatpush1.bf16.msra.mxu0 0
  %70 = vmatprep.subr.bf16.mxu0 0
  %71 = vmatpush1.bf16.msra.mxu0 0
  %72 = vmatprep.subr.bf16.mxu0 0
  %73 = vmatpush1.bf16.msra.mxu0 0
  %74 = vmatprep.subr.bf16.mxu0 0
  %75 = vmatpush1.bf16.msra.mxu0 0
  %76 = vmatprep.subr.bf16.mxu0 0
  %77 = vmatpush1.bf16.msra.mxu0 0
  %78 = vmatprep.subr.bf16.mxu0 0
  %79 = vmatpush1.bf16.msra.mxu0 0
  %80 = vmatprep.subr.bf16.mxu0 0
  %81 = vmatpush1.bf16.msra.mxu0 0
  %82 = vmatprep.subr.bf16.mxu0 0
  %83 = vmatpush1.bf16.msra.mxu0 0
  %84 = vmatprep.subr.bf16.mxu0 0
  %85 = vmatpush1.bf16.msra.mxu0 0
  %86 = vmatprep.subr.bf16.mxu0 0
  %87 = vmatpush1.bf16.msra.mxu0 0
  %88 = vmatprep.subr.bf16.mxu0 0
  %89 = vmatpush1.bf16.msra.mxu0 0
  %90 = vmatprep.mubr.bf16.mxu0 0
  %91 = vmatmul.mubr.bf16.gmra.mrb[0].mxu0 %v53
  %v92 = vpop.f32.mrb[0].mxu0
  %v93 = vadd.f32 0.0, %v92
  %v94 = vpop.f32.mrb[0].mxu0
  %v95 = vpop.f32.mrb[0].mxu0
  %v96 = vadd.f32 0.0, %v95
  %v97 = vpop.f32.mrb[0].mxu0
  %98 = vmatprep.mubr.bf16.mxu0 0
  %99 = vmatmul.mubr.bf16.gmra.mrb[0].mxu0 %v56
  %v100 = vpop.f32.mrb[0].mxu0
  %v101 = vadd.f32 0.0, %v100
  %v102 = vpop.f32.mrb[0].mxu0
  %v103 = vpop.f32.mrb[0].mxu0
  %v104 = vpop.f32.mrb[0].mxu0
  %105 = vdwg.mxu0
  %106 = vmatprep.subr.bf16.mxu0 0
  %107 = vmatpush1.bf16.msra.mxu0 %v32
  %108 = vmatprep.subr.bf16.mxu0 0
  %109 = vmatpush1.bf16.msra.mxu0 0
  %110 = vmatprep.subr.bf16.mxu0 0
  %111 = vmatpush1.bf16.msra.mxu0 0
  %112 = vmatprep.subr.bf16.mxu0 0
  %113 = vmatpush1.bf16.msra.mxu0 0
  %114 = vmatprep.subr.bf16.mxu0 0
  %115 = vmatpush1.bf16.msra.mxu0 0
  %116 = vmatprep.subr.bf16.mxu0 0
  %117 = vmatpush1.bf16.msra.mxu0 0
  %118 = vmatprep.subr.bf16.mxu0 0
  %119 = vmatpush1.bf16.msra.mxu0 0
  %120 = vmatprep.subr.bf16.mxu0 0
  %121 = vmatpush1.bf16.msra.mxu0 0
  %122 = vmatprep.subr.bf16.mxu0 0
  %123 = vmatpush1.bf16.msra.mxu0 0
  %124 = vmatprep.subr.bf16.mxu0 0
  %125 = vmatpush1.bf16.msra.mxu0 0
  %126 = vmatprep.subr.bf16.mxu0 0
  %127 = vmatpush1.bf16.msra.mxu0 0
  %128 = vmatprep.subr.bf16.mxu0 0
  %129 = vmatpush1.bf16.msra.mxu0 0
  %130 = vmatprep.subr.bf16.mxu0 0
  %131 = vmatpush1.bf16.msra.mxu0 0
  %132 = vmatprep.subr.bf16.mxu0 0
  %133 = vmatpush1.bf16.msra.mxu0 0
  %134 = vmatprep.subr.bf16.mxu0 0
  %135 = vmatpush1.bf16.msra.mxu0 0
  %136 = vmatprep.subr.bf16.mxu0 0
  %137 = vmatpush1.bf16.msra.mxu0 0
  %138 = vmatprep.mubr.bf16.mxu0 0
  %139 = vmatmul.mubr.bf16.gmra.mrb[0].mxu0 %v53
  %v140 = vpop.f32.mrb[0].mxu0
  %v141 = vadd.f32 %v93, %v140
  %v142 = vpop.f32.mrb[0].mxu0
  %v143 = vpop.f32.mrb[0].mxu0
  %v144 = vadd.f32 %v96, %v143
  %v145 = vpop.f32.mrb[0].mxu0
  %146 = vmatprep.mubr.bf16.mxu0 0
  %147 = vmatmul.mubr.bf16.gmra.mrb[0].mxu0 %v56
  %v148 = vpop.f32.mrb[0].mxu0
  %v149 = vadd.f32 %v101, %v148
  %v150 = vpop.f32.mrb[0].mxu0
  %v151 = vpop.f32.mrb[0].mxu0
  %v152 = vpop.f32.mrb[0].mxu0
  %153 = vdwg.mxu0
  %154 = vmatprep.subr.bf16.mxu0 0
  %155 = vmatpush1.bf16.msra.mxu0 %v42
  %156 = vmatprep.subr.bf16.mxu0 0
  %157 = vmatpush1.bf16.msra.mxu0 0
  %158 = vmatprep.subr.bf16.mxu0 0
  %159 = vmatpush1.bf16.msra.mxu0 0
  %160 = vmatprep.subr.bf16.mxu0 0
  %161 = vmatpush1.bf16.msra.mxu0 0
  %162 = vmatprep.subr.bf16.mxu0 0
  %163 = vmatpush1.bf16.msra.mxu0 0
  %164 = vmatprep.subr.bf16.mxu0 0
  %165 = vmatpush1.bf16.msra.mxu0 0
  %166 = vmatprep.subr.bf16.mxu0 0
  %167 = vmatpush1.bf16.msra.mxu0 0
  %168 = vmatprep.subr.bf16.mxu0 0
  %169 = vmatpush1.bf16.msra.mxu0 0
  %170 = vmatprep.subr.bf16.mxu0 0
  %171 = vmatpush1.bf16.msra.mxu0 0
  %172 = vmatprep.subr.bf16.mxu0 0
  %173 = vmatpush1.bf16.msra.mxu0 0
  %174 = vmatprep.subr.bf16.mxu0 0
  %175 = vmatpush1.bf16.msra.mxu0 0
  %176 = vmatprep.subr.bf16.mxu0 0
  %177 = vmatpush1.bf16.msra.mxu0 0
  %178 = vmatprep.subr.bf16.mxu0 0
  %179 = vmatpush1.bf16.msra.mxu0 0
  %180 = vmatprep.subr.bf16.mxu0 0
  %181 = vmatpush1.bf16.msra.mxu0 0
  %182 = vmatprep.subr.bf16.mxu0 0
  %183 = vmatpush1.bf16.msra.mxu0 0
  %184 = vmatprep.subr.bf16.mxu0 0
  %185 = vmatpush1.bf16.msra.mxu0 0
  %186 = vmatprep.mubr.bf16.mxu0 0
  %187 = vmatmul.mubr.bf16.gmra.mrb[0].mxu0 %v53
  %v188 = vpop.f32.mrb[0].mxu0
  %v189 = vadd.f32 0.0, %v188
  %v190 = vpop.f32.mrb[0].mxu0
  %v191 = vpop.f32.mrb[0].mxu0
  %v192 = vadd.f32 0.0, %v191
  %v193 = vpop.f32.mrb[0].mxu0
  %194 = vmatprep.mubr.bf16.mxu0 0
  %195 = vmatmul.mubr.bf16.gmra.mrb[0].mxu0 %v56
  %v196 = vpop.f32.mrb[0].mxu0
  %v197 = vadd.f32 0.0, %v196
  %v198 = vpop.f32.mrb[0].mxu0
  %v199 = vpop.f32.mrb[0].mxu0
  %v200 = vpop.f32.mrb[0].mxu0
  %201 = vdwg.mxu0
  %v202 = vadd.f32 %v141, %v189
  %v203 = vadd.f32 %v144, %v192
  %v204 = vadd.f32 %v149, %v197
  %v205 = vld [vmem:[%s4] sm:$0xff]
  %v206 = vld [vmem:[%s4 + $0x8] sm:$0xff]
  %v207 = vld [vmem:[%s4 + $0x10] sm:$0xff]
  %v208 = vld [vmem:[%s4 + $0x18] sm:$0xff]
  %v209 = vld [vmem:[%s4 + $0x20] sm:$0xff]
  %v210 = vld [vmem:[%s4 + $0x28] sm:$0xff]
  %v211 = vld [vmem:[%s4 + $0x30] sm:$0xff]
  %v212 = vld [vmem:[%s4 + $0x38] sm:$0xff]
  %v213 = vld [vmem:[%s4 + $0x40] sm:$0xff]
  %v214 = vld [vmem:[%s4 + $0x48] sm:$0xff]
  %v215 = vld [vmem:[%s4 + $0x50] sm:$0xff]
  %v216 = vld [vmem:[%s4 + $0x58] sm:$0xff]
  %v217 = vld [vmem:[%s4 + $0x60] sm:$0xff]
  %v218 = vld [vmem:[%s4 + $0x68] sm:$0xff]
  %v219 = vld [vmem:[%s4 + $0x70] sm:$0xff]
  %v220 = vld [vmem:[%s4 + $0x78] sm:$0xff]
  %v221 = vpack.c.bf16 %v203, %v202
  %v222 = vpack.c.bf16 %v204, %v204
  %v223 = vunpack.c.l.bf16 %v221
  %v224 = vunpack.c.h.bf16 %v221
  %v225 = vunpack.c.l.bf16 %v222
  %v226 = vsub.f32 %v202, %v223
  %v227 = vsub.f32 %v203, %v224
  %v228 = vsub.f32 %v204, %v225
  %v229 = vpack.c.bf16 %v227, %v226
  %v230 = vpack.c.bf16 %v228, %v228
  %v231 = vunpack.c.l.bf16 %v229
  %v232 = vunpack.c.h.bf16 %v229
  %v233 = vunpack.c.l.bf16 %v230
  %v234 = vsub.f32 %v226, %v231
  %v235 = vsub.f32 %v227, %v232
  %v236 = vsub.f32 %v228, %v233
  %v237 = vpack.c.bf16 %v235, %v234
  %v238 = vpack.c.bf16 %v236, %v236
  %v255 = vunpack.c.l.b16 %v205
  %v256 = vunpack.c.h.b16 %v205
  %v257 = vunpack.c.l.b16 %v206
  %v258 = vunpack.c.h.b16 %v206
  %v259 = vunpack.c.l.b16 %v207
  %v260 = vunpack.c.h.b16 %v207
  %v261 = vunpack.c.l.b16 %v208
  %v262 = vunpack.c.h.b16 %v208
  %v263 = vunpack.c.l.b16 %v209
  %v264 = vunpack.c.h.b16 %v209
  %v265 = vunpack.c.l.b16 %v210
  %v266 = vunpack.c.h.b16 %v210
  %v267 = vunpack.c.l.b16 %v211
  %v268 = vunpack.c.h.b16 %v211
  %v269 = vunpack.c.l.b16 %v212
  %v270 = vunpack.c.h.b16 %v212
  %v271 = vunpack.c.l.b16 %v213
  %v272 = vunpack.c.h.b16 %v213
  %v273 = vunpack.c.l.b16 %v214
  %v274 = vunpack.c.h.b16 %v214
  %v275 = vunpack.c.l.b16 %v215
  %v276 = vunpack.c.h.b16 %v215
  %v277 = vunpack.c.l.b16 %v216
  %v278 = vunpack.c.h.b16 %v216
  %v279 = vunpack.c.l.b16 %v217
  %v280 = vunpack.c.h.b16 %v217
  %v281 = vunpack.c.l.b16 %v218
  %v282 = vunpack.c.h.b16 %v218
  %v283 = vunpack.c.l.b16 %v219
  %v284 = vunpack.c.h.b16 %v219
  %v285 = vunpack.c.l.b16 %v220
  %v286 = vunpack.c.h.b16 %v220
  %v287 = vpack.c.b16 %v257, %v255
  %v288 = vpack.c.b16 %v258, %v256
  %v289 = vpack.c.b16 %v261, %v259
  %v290 = vpack.c.b16 %v262, %v260
  %v291 = vpack.c.b16 %v265, %v263
  %v292 = vpack.c.b16 %v266, %v264
  %v293 = vpack.c.b16 %v269, %v267
  %v294 = vpack.c.b16 %v270, %v268
  %v295 = vpack.c.b16 %v273, %v271
  %v296 = vpack.c.b16 %v274, %v272
  %v297 = vpack.c.b16 %v277, %v275
  %v298 = vpack.c.b16 %v278, %v276
  %v299 = vpack.c.b16 %v281, %v279
  %v300 = vpack.c.b16 %v282, %v280
  %v301 = vpack.c.b16 %v285, %v283
  %v302 = vpack.c.b16 %v286, %v284
  %319 = vmatprep.subr.bf16.mxu0 %v288
  %320 = vmatpush1.bf16.msra.mxu0 %v287
  %321 = vmatprep.subr.bf16.mxu0 %v290
  %322 = vmatpush1.bf16.msra.mxu0 %v289
  %323 = vmatprep.subr.bf16.mxu0 %v292
  %324 = vmatpush1.bf16.msra.mxu0 %v291
  %325 = vmatprep.subr.bf16.mxu0 %v294
  %326 = vmatpush1.bf16.msra.mxu0 %v293
  %327 = vmatprep.subr.bf16.mxu0 %v296
  %328 = vmatpush1.bf16.msra.mxu0 %v295
  %329 = vmatprep.subr.bf16.mxu0 %v298
  %330 = vmatpush1.bf16.msra.mxu0 %v297
  %331 = vmatprep.subr.bf16.mxu0 %v300
  %332 = vmatpush1.bf16.msra.mxu0 %v299
  %333 = vmatprep.subr.bf16.mxu0 %v302
  %334 = vmatpush1.bf16.msra.mxu0 %v301
  %335 = vmatprep.subr.bf16.mxu0 0
  %336 = vmatpush1.bf16.msra.mxu0 0
  %337 = vmatprep.subr.bf16.mxu0 0
  %338 = vmatpush1.bf16.msra.mxu0 0
  %339 = vmatprep.subr.bf16.mxu0 0
  %340 = vmatpush1.bf16.msra.mxu0 0
  %341 = vmatprep.subr.bf16.mxu0 0
  %342 = vmatpush1.bf16.msra.mxu0 0
  %343 = vmatprep.subr.bf16.mxu0 0
  %344 = vmatpush1.bf16.msra.mxu0 0
  %345 = vmatprep.subr.bf16.mxu0 0
  %346 = vmatpush1.bf16.msra.mxu0 0
  %347 = vmatprep.subr.bf16.mxu0 0
  %348 = vmatpush1.bf16.msra.mxu0 0
  %349 = vmatprep.subr.bf16.mxu0 0
  %350 = vmatpush1.bf16.msra.mxu0 0
  %351 = vmatprep.mubr.bf16.mxu0 0
  %352 = vmatmul.mubr.bf16.gmra.mrb[0].mxu0 %v229
  %v353 = vpop.f32.mrb[0].mxu0
  %v354 = vadd.f32 0.0, %v353
  %v355 = vpop.f32.mrb[0].mxu0
  %v356 = vadd.f32 0.0, %v355
  %v357 = vpop.f32.mrb[0].mxu0
  %v358 = vadd.f32 0.0, %v357
  %v359 = vpop.f32.mrb[0].mxu0
  %v360 = vadd.f32 0.0, %v359
  %361 = vmatprep.mubr.bf16.mxu0 0
  %362 = vmatmul.mubr.bf16.gmra.mrb[0].mxu0 %v230
  %v363 = vpop.f32.mrb[0].mxu0
  %v364 = vadd.f32 0.0, %v363
  %v365 = vpop.f32.mrb[0].mxu0
  %v366 = vadd.f32 0.0, %v365
  %v367 = vpop.f32.mrb[0].mxu0
  %v368 = vpop.f32.mrb[0].mxu0
  %369 = vdwg.mxu0
  %370 = vmatprep.subr.bf16.mxu0 %v288
  %371 = vmatpush1.bf16.msra.mxu0 %v287
  %372 = vmatprep.subr.bf16.mxu0 %v290
  %373 = vmatpush1.bf16.msra.mxu0 %v289
  %374 = vmatprep.subr.bf16.mxu0 %v292
  %375 = vmatpush1.bf16.msra.mxu0 %v291
  %376 = vmatprep.subr.bf16.mxu0 %v294
  %377 = vmatpush1.bf16.msra.mxu0 %v293
  %378 = vmatprep.subr.bf16.mxu0 %v296
  %379 = vmatpush1.bf16.msra.mxu0 %v295
  %380 = vmatprep.subr.bf16.mxu0 %v298
  %381 = vmatpush1.bf16.msra.mxu0 %v297
  %382 = vmatprep.subr.bf16.mxu0 %v300
  %383 = vmatpush1.bf16.msra.mxu0 %v299
  %384 = vmatprep.subr.bf16.mxu0 %v302
  %385 = vmatpush1.bf16.msra.mxu0 %v301
  %386 = vmatprep.subr.bf16.mxu0 0
  %387 = vmatpush1.bf16.msra.mxu0 0
  %388 = vmatprep.subr.bf16.mxu0 0
  %389 = vmatpush1.bf16.msra.mxu0 0
  %390 = vmatprep.subr.bf16.mxu0 0
  %391 = vmatpush1.bf16.msra.mxu0 0
  %392 = vmatprep.subr.bf16.mxu0 0
  %393 = vmatpush1.bf16.msra.mxu0 0
  %394 = vmatprep.subr.bf16.mxu0 0
  %395 = vmatpush1.bf16.msra.mxu0 0
  %396 = vmatprep.subr.bf16.mxu0 0
  %397 = vmatpush1.bf16.msra.mxu0 0
  %398 = vmatprep.subr.bf16.mxu0 0
  %399 = vmatpush1.bf16.msra.mxu0 0
  %400 = vmatprep.subr.bf16.mxu0 0
  %401 = vmatpush1.bf16.msra.mxu0 0
  %402 = vmatprep.mubr.bf16.mxu0 0
  %403 = vmatmul.mubr.bf16.gmra.mrb[0].mxu0 %v221
  %v404 = vpop.f32.mrb[0].mxu0
  %v405 = vadd.f32 %v354, %v404
  %v406 = vpop.f32.mrb[0].mxu0
  %v407 = vadd.f32 %v356, %v406
  %v408 = vpop.f32.mrb[0].mxu0
  %v409 = vadd.f32 %v358, %v408
  %v410 = vpop.f32.mrb[0].mxu0
  %v411 = vadd.f32 %v360, %v410
  %412 = vmatprep.mubr.bf16.mxu0 0
  %413 = vmatmul.mubr.bf16.gmra.mrb[0].mxu0 %v222
  %v414 = vpop.f32.mrb[0].mxu0
  %v415 = vadd.f32 %v364, %v414
  %v416 = vpop.f32.mrb[0].mxu0
  %v417 = vadd.f32 %v366, %v416
  %v418 = vpop.f32.mrb[0].mxu0
  %v419 = vpop.f32.mrb[0].mxu0
  %420 = vdwg.mxu0
  %421 = vmatprep.subr.bf16.mxu0 %v288
  %422 = vmatpush1.bf16.msra.mxu0 %v287
  %423 = vmatprep.subr.bf16.mxu0 %v290
  %424 = vmatpush1.bf16.msra.mxu0 %v289
  %425 = vmatprep.subr.bf16.mxu0 %v292
  %426 = vmatpush1.bf16.msra.mxu0 %v291
  %427 = vmatprep.subr.bf16.mxu0 %v294
  %428 = vmatpush1.bf16.msra.mxu0 %v293
  %429 = vmatprep.subr.bf16.mxu0 %v296
  %430 = vmatpush1.bf16.msra.mxu0 %v295
  %431 = vmatprep.subr.bf16.mxu0 %v298
  %432 = vmatpush1.bf16.msra.mxu0 %v297
  %433 = vmatprep.subr.bf16.mxu0 %v300
  %434 = vmatpush1.bf16.msra.mxu0 %v299
  %435 = vmatprep.subr.bf16.mxu0 %v302
  %436 = vmatpush1.bf16.msra.mxu0 %v301
  %437 = vmatprep.subr.bf16.mxu0 0
  %438 = vmatpush1.bf16.msra.mxu0 0
  %439 = vmatprep.subr.bf16.mxu0 0
  %440 = vmatpush1.bf16.msra.mxu0 0
  %441 = vmatprep.subr.bf16.mxu0 0
  %442 = vmatpush1.bf16.msra.mxu0 0
  %443 = vmatprep.subr.bf16.mxu0 0
  %444 = vmatpush1.bf16.msra.mxu0 0
  %445 = vmatprep.subr.bf16.mxu0 0
  %446 = vmatpush1.bf16.msra.mxu0 0
  %447 = vmatprep.subr.bf16.mxu0 0
  %448 = vmatpush1.bf16.msra.mxu0 0
  %449 = vmatprep.subr.bf16.mxu0 0
  %450 = vmatpush1.bf16.msra.mxu0 0
  %451 = vmatprep.subr.bf16.mxu0 0
  %452 = vmatpush1.bf16.msra.mxu0 0
  %453 = vmatprep.mubr.bf16.mxu0 0
  %454 = vmatmul.mubr.bf16.gmra.mrb[0].mxu0 %v237
  %v455 = vpop.f32.mrb[0].mxu0
  %v456 = vadd.f32 0.0, %v455
  %v457 = vpop.f32.mrb[0].mxu0
  %v458 = vadd.f32 0.0, %v457
  %v459 = vpop.f32.mrb[0].mxu0
  %v460 = vadd.f32 0.0, %v459
  %v461 = vpop.f32.mrb[0].mxu0
  %v462 = vadd.f32 0.0, %v461
  %463 = vmatprep.mubr.bf16.mxu0 0
  %464 = vmatmul.mubr.bf16.gmra.mrb[0].mxu0 %v238
  %v465 = vpop.f32.mrb[0].mxu0
  %v466 = vadd.f32 0.0, %v465
  %v467 = vpop.f32.mrb[0].mxu0
  %v468 = vadd.f32 0.0, %v467
  %v469 = vpop.f32.mrb[0].mxu0
  %v470 = vpop.f32.mrb[0].mxu0
  %471 = vdwg.mxu0
  %v472 = vadd.f32 %v405, %v456
  %v473 = vadd.f32 %v407, %v458
  %v474 = vadd.f32 %v409, %v460
  %v475 = vadd.f32 %v411, %v462
  %v476 = vadd.f32 %v415, %v466
  %v477 = vadd.f32 %v417, %v468
  %v478 = vand.u32 2147483647, %v472
  %v479 = vand.u32 2147483647, %v473
  %v480 = vand.u32 2147483647, %v474
  %v481 = vand.u32 2147483647, %v475
  %v482 = vand.u32 2147483647, %v476
  %v483 = vand.u32 2147483647, %v477
  %v484 = vld [vmem:[%s2] sm:$0xf]
  %v485 = vld [vmem:[%s2 + $0x4] sm:$0xf]
  %v486 = vpack.c.bf16 %v480, %v478
  %v487 = vpack.c.bf16 %v481, %v479
  %v488 = vpack.c.bf16 %v482, %v482
  %v489 = vpack.c.bf16 %v483, %v483
  %v490 = vunpack.c.l.bf16 %v486
  %v491 = vunpack.c.l.bf16 %v487
  %v492 = vunpack.c.h.bf16 %v486
  %v493 = vunpack.c.h.bf16 %v487
  %v494 = vunpack.c.l.bf16 %v488
  %v495 = vunpack.c.l.bf16 %v489
  %v496 = vsub.f32 %v478, %v490
  %v497 = vsub.f32 %v479, %v491
  %v498 = vsub.f32 %v480, %v492
  %v499 = vsub.f32 %v481, %v493
  %v500 = vsub.f32 %v482, %v494
  %v501 = vsub.f32 %v483, %v495
  %v502 = vpack.c.bf16 %v498, %v496
  %v503 = vpack.c.bf16 %v499, %v497
  %v504 = vpack.c.bf16 %v500, %v500
  %v505 = vpack.c.bf16 %v501, %v501
  %v506 = vunpack.c.l.bf16 %v502
  %v507 = vunpack.c.l.bf16 %v503
  %v508 = vunpack.c.h.bf16 %v502
  %v509 = vunpack.c.h.bf16 %v503
  %v510 = vunpack.c.l.bf16 %v504
  %v511 = vunpack.c.l.bf16 %v505
  %v512 = vsub.f32 %v496, %v506
  %v513 = vsub.f32 %v497, %v507
  %v514 = vsub.f32 %v498, %v508
  %v515 = vsub.f32 %v499, %v509
  %v516 = vsub.f32 %v500, %v510
  %v517 = vsub.f32 %v501, %v511
  %v518 = vpack.c.bf16 %v514, %v512
  %v519 = vpack.c.bf16 %v515, %v513
  %v520 = vpack.c.bf16 %v516, %v516
  %v521 = vpack.c.bf16 %v517, %v517
  %v524 = vunpack.c.l.b16 %v484
  %v525 = vunpack.c.l.b16 %v485
  %v526 = vpack.c.b16 %v525, %v524
  %vm527 = vcmask 146432
  %v529 = vsel %vm527, %v526, 0
  %vm531 = vcmask 1040384
  %v533 = vsel %vm531, %v504, 0
  %v536 = vsel %vm531, %v505, 0
  %538 = vmatprep.subr.bf16.mxu0 %v503
  %539 = vmatpush1.bf16.msra.mxu0 %v502
  %540 = vmatprep.subr.bf16.mxu0 %v536
  %541 = vmatpush1.bf16.msra.mxu0 %v533
  %542 = vmatprep.subr.bf16.mxu0 0
  %543 = vmatpush1.bf16.msra.mxu0 0
  %544 = vmatprep.subr.bf16.mxu0 0
  %545 = vmatpush1.bf16.msra.mxu0 0
  %546 = vmatprep.subr.bf16.mxu0 0
  %547 = vmatpush1.bf16.msra.mxu0 0
  %548 = vmatprep.subr.bf16.mxu0 0
  %549 = vmatpush1.bf16.msra.mxu0 0
  %550 = vmatprep.subr.bf16.mxu0 0
  %551 = vmatpush1.bf16.msra.mxu0 0
  %552 = vmatprep.subr.bf16.mxu0 0
  %553 = vmatpush1.bf16.msra.mxu0 0
  %554 = vmatprep.subr.bf16.mxu0 0
  %555 = vmatpush1.bf16.msra.mxu0 0
  %556 = vmatprep.subr.bf16.mxu0 0
  %557 = vmatpush1.bf16.msra.mxu0 0
  %558 = vmatprep.subr.bf16.mxu0 0
  %559 = vmatpush1.bf16.msra.mxu0 0
  %560 = vmatprep.subr.bf16.mxu0 0
  %561 = vmatpush1.bf16.msra.mxu0 0
  %562 = vmatprep.subr.bf16.mxu0 0
  %563 = vmatpush1.bf16.msra.mxu0 0
  %564 = vmatprep.subr.bf16.mxu0 0
  %565 = vmatpush1.bf16.msra.mxu0 0
  %566 = vmatprep.subr.bf16.mxu0 0
  %567 = vmatpush1.bf16.msra.mxu0 0
  %568 = vmatprep.subr.bf16.mxu0 0
  %569 = vmatpush1.bf16.msra.mxu0 0
  %570 = vmatprep.mubr.bf16.mxu0 0
  %571 = vmatmul.mubr.bf16.gmra.mrb[0].mxu0 %v529
  %v572 = vpop.f32.mrb[0].mxu0
  %v573 = vadd.f32 0.0, %v572
  %v574 = vpop.f32.mrb[0].mxu0
  %v575 = vadd.f32 0.0, %v574
  %v576 = vpop.f32.mrb[0].mxu0
  %v577 = vadd.f32 0.0, %v576
  %v578 = vpop.f32.mrb[0].mxu0
  %v579 = vadd.f32 0.0, %v578
  %580 = vdwg.mxu0
  %v582 = vsel %vm531, %v488, 0
  %v585 = vsel %vm531, %v489, 0
  %587 = vmatprep.subr.bf16.mxu0 %v487
  %588 = vmatpush1.bf16.msra.mxu0 %v486
  %589 = vmatprep.subr.bf16.mxu0 %v585
  %590 = vmatpush1.bf16.msra.mxu0 %v582
  %591 = vmatprep.subr.bf16.mxu0 0
  %592 = vmatpush1.bf16.msra.mxu0 0
  %593 = vmatprep.subr.bf16.mxu0 0
  %594 = vmatpush1.bf16.msra.mxu0 0
  %595 = vmatprep.subr.bf16.mxu0 0
  %596 = vmatpush1.bf16.msra.mxu0 0
  %597 = vmatprep.subr.bf16.mxu0 0
  %598 = vmatpush1.bf16.msra.mxu0 0
  %599 = vmatprep.subr.bf16.mxu0 0
  %600 = vmatpush1.bf16.msra.mxu0 0
  %601 = vmatprep.subr.bf16.mxu0 0
  %602 = vmatpush1.bf16.msra.mxu0 0
  %603 = vmatprep.subr.bf16.mxu0 0
  %604 = vmatpush1.bf16.msra.mxu0 0
  %605 = vmatprep.subr.bf16.mxu0 0
  %606 = vmatpush1.bf16.msra.mxu0 0
  %607 = vmatprep.subr.bf16.mxu0 0
  %608 = vmatpush1.bf16.msra.mxu0 0
  %609 = vmatprep.subr.bf16.mxu0 0
  %610 = vmatpush1.bf16.msra.mxu0 0
  %611 = vmatprep.subr.bf16.mxu0 0
  %612 = vmatpush1.bf16.msra.mxu0 0
  %613 = vmatprep.subr.bf16.mxu0 0
  %614 = vmatpush1.bf16.msra.mxu0 0
  %615 = vmatprep.subr.bf16.mxu0 0
  %616 = vmatpush1.bf16.msra.mxu0 0
  %617 = vmatprep.subr.bf16.mxu0 0
  %618 = vmatpush1.bf16.msra.mxu0 0
  %619 = vmatprep.mubr.bf16.mxu0 0
  %620 = vmatmul.mubr.bf16.gmra.mrb[0].mxu0 %v529
  %v621 = vpop.f32.mrb[0].mxu0
  %v622 = vadd.f32 %v573, %v621
  %v623 = vpop.f32.mrb[0].mxu0
  %v624 = vadd.f32 %v575, %v623
  %v625 = vpop.f32.mrb[0].mxu0
  %v626 = vadd.f32 %v577, %v625
  %v627 = vpop.f32.mrb[0].mxu0
  %v628 = vadd.f32 %v579, %v627
  %629 = vdwg.mxu0
  %v631 = vsel %vm531, %v520, 0
  %v634 = vsel %vm531, %v521, 0
  %636 = vmatprep.subr.bf16.mxu0 %v519
  %637 = vmatpush1.bf16.msra.mxu0 %v518
  %638 = vmatprep.subr.bf16.mxu0 %v634
  %639 = vmatpush1.bf16.msra.mxu0 %v631
  %640 = vmatprep.subr.bf16.mxu0 0
  %641 = vmatpush1.bf16.msra.mxu0 0
  %642 = vmatprep.subr.bf16.mxu0 0
  %643 = vmatpush1.bf16.msra.mxu0 0
  %644 = vmatprep.subr.bf16.mxu0 0
  %645 = vmatpush1.bf16.msra.mxu0 0
  %646 = vmatprep.subr.bf16.mxu0 0
  %647 = vmatpush1.bf16.msra.mxu0 0
  %648 = vmatprep.subr.bf16.mxu0 0
  %649 = vmatpush1.bf16.msra.mxu0 0
  %650 = vmatprep.subr.bf16.mxu0 0
  %651 = vmatpush1.bf16.msra.mxu0 0
  %652 = vmatprep.subr.bf16.mxu0 0
  %653 = vmatpush1.bf16.msra.mxu0 0
  %654 = vmatprep.subr.bf16.mxu0 0
  %655 = vmatpush1.bf16.msra.mxu0 0
  %656 = vmatprep.subr.bf16.mxu0 0
  %657 = vmatpush1.bf16.msra.mxu0 0
  %658 = vmatprep.subr.bf16.mxu0 0
  %659 = vmatpush1.bf16.msra.mxu0 0
  %660 = vmatprep.subr.bf16.mxu0 0
  %661 = vmatpush1.bf16.msra.mxu0 0
  %662 = vmatprep.subr.bf16.mxu0 0
  %663 = vmatpush1.bf16.msra.mxu0 0
  %664 = vmatprep.subr.bf16.mxu0 0
  %665 = vmatpush1.bf16.msra.mxu0 0
  %666 = vmatprep.subr.bf16.mxu0 0
  %667 = vmatpush1.bf16.msra.mxu0 0
  %668 = vmatprep.mubr.bf16.mxu0 0
  %669 = vmatmul.mubr.bf16.gmra.mrb[0].mxu0 %v529
  %v670 = vpop.f32.mrb[0].mxu0
  %v671 = vadd.f32 0.0, %v670
  %v672 = vpop.f32.mrb[0].mxu0
  %v673 = vadd.f32 0.0, %v672
  %v674 = vpop.f32.mrb[0].mxu0
  %v675 = vadd.f32 0.0, %v674
  %v676 = vpop.f32.mrb[0].mxu0
  %v677 = vadd.f32 0.0, %v676
  %678 = vdwg.mxu0
  %v679 = vadd.f32 %v622, %v671
  %v680 = vadd.f32 %v624, %v673
  %v681 = vadd.f32 %v626, %v675
  %v682 = vadd.f32 %v628, %v677
  %v683 = vld [vmem:[%s5] sm:$0xf]
  %v684 = vld [vmem:[%s5 + $0x4] sm:$0xf]
  %v685 = vld [vmem:[%s5 + $0x8] sm:$0xf]
  %v686 = vld [vmem:[%s5 + $0xc] sm:$0xf]
  %v687 = vld [vmem:[%s5 + $0x10] sm:$0xf]
  %v688 = vld [vmem:[%s5 + $0x14] sm:$0xf]
  %v689 = vld [vmem:[%s5 + $0x18] sm:$0xf]
  %v690 = vld [vmem:[%s5 + $0x1c] sm:$0xf]
  %v691 = vld [vmem:[%s5 + $0x20] sm:$0xf]
  %v692 = vld [vmem:[%s5 + $0x24] sm:$0xf]
  %v693 = vld [vmem:[%s5 + $0x28] sm:$0xf]
  %v694 = vld [vmem:[%s5 + $0x2c] sm:$0xf]
  %v695 = vld [vmem:[%s5 + $0x30] sm:$0xf]
  %v696 = vld [vmem:[%s5 + $0x34] sm:$0xf]
  %v697 = vld [vmem:[%s5 + $0x38] sm:$0xf]
  %v698 = vld [vmem:[%s5 + $0x3c] sm:$0xf]
  %v699 = vld [vmem:[%s5 + $0x40] sm:$0xf]
  %v700 = vld [vmem:[%s5 + $0x44] sm:$0xf]
  %v701 = vpack.c.bf16 %v681, %v679
  %v702 = vpack.c.bf16 %v682, %v680
  %v703 = vunpack.c.l.bf16 %v701
  %v704 = vunpack.c.l.bf16 %v702
  %v705 = vunpack.c.h.bf16 %v701
  %v706 = vunpack.c.h.bf16 %v702
  %v707 = vsub.f32 %v679, %v703
  %v708 = vsub.f32 %v680, %v704
  %v709 = vsub.f32 %v681, %v705
  %v710 = vsub.f32 %v682, %v706
  %v711 = vpack.c.bf16 %v709, %v707
  %v712 = vpack.c.bf16 %v710, %v708
  %v713 = vunpack.c.l.bf16 %v711
  %v714 = vunpack.c.l.bf16 %v712
  %v715 = vunpack.c.h.bf16 %v711
  %v716 = vunpack.c.h.bf16 %v712
  %v717 = vsub.f32 %v707, %v713
  %v718 = vsub.f32 %v708, %v714
  %v719 = vsub.f32 %v709, %v715
  %v720 = vsub.f32 %v710, %v716
  %v721 = vpack.c.bf16 %v719, %v717
  %v722 = vpack.c.bf16 %v720, %v718
  %v741 = vunpack.c.l.b16 %v683
  %v742 = vunpack.c.l.b16 %v684
  %v743 = vunpack.c.l.b16 %v685
  %v744 = vunpack.c.l.b16 %v686
  %v745 = vunpack.c.l.b16 %v687
  %v746 = vunpack.c.l.b16 %v688
  %v747 = vunpack.c.l.b16 %v689
  %v748 = vunpack.c.l.b16 %v690
  %v749 = vunpack.c.l.b16 %v691
  %v750 = vunpack.c.l.b16 %v692
  %v751 = vunpack.c.l.b16 %v693
  %v752 = vunpack.c.l.b16 %v694
  %v753 = vunpack.c.l.b16 %v695
  %v754 = vunpack.c.l.b16 %v696
  %v755 = vunpack.c.l.b16 %v697
  %v756 = vunpack.c.l.b16 %v698
  %v757 = vunpack.c.l.b16 %v699
  %v758 = vunpack.c.l.b16 %v700
  %v759 = vpack.c.b16 %v742, %v741
  %v760 = vpack.c.b16 %v744, %v743
  %v761 = vpack.c.b16 %v746, %v745
  %v762 = vpack.c.b16 %v748, %v747
  %v763 = vpack.c.b16 %v750, %v749
  %v764 = vpack.c.b16 %v752, %v751
  %v765 = vpack.c.b16 %v754, %v753
  %v766 = vpack.c.b16 %v756, %v755
  %v767 = vpack.c.b16 %v758, %v757
  %v778 = vsel %vm51, %v712, 0
  %780 = vmatprep.subr.bf16.mxu0 0
  %781 = vmatpush1.bf16.msra.mxu0 %v759
  %782 = vmatprep.subr.bf16.mxu0 0
  %783 = vmatpush1.bf16.msra.mxu0 %v760
  %784 = vmatprep.subr.bf16.mxu0 0
  %785 = vmatpush1.bf16.msra.mxu0 %v761
  %786 = vmatprep.subr.bf16.mxu0 0
  %787 = vmatpush1.bf16.msra.mxu0 %v762
  %788 = vmatprep.subr.bf16.mxu0 0
  %789 = vmatpush1.bf16.msra.mxu0 %v763
  %790 = vmatprep.subr.bf16.mxu0 0
  %791 = vmatpush1.bf16.msra.mxu0 %v764
  %792 = vmatprep.subr.bf16.mxu0 0
  %793 = vmatpush1.bf16.msra.mxu0 %v765
  %794 = vmatprep.subr.bf16.mxu0 0
  %795 = vmatpush1.bf16.msra.mxu0 %v766
  %796 = vmatprep.subr.bf16.mxu0 0
  %797 = vmatpush1.bf16.msra.mxu0 %v767
  %798 = vmatprep.subr.bf16.mxu0 0
  %799 = vmatpush1.bf16.msra.mxu0 0
  %800 = vmatprep.subr.bf16.mxu0 0
  %801 = vmatpush1.bf16.msra.mxu0 0
  %802 = vmatprep.subr.bf16.mxu0 0
  %803 = vmatpush1.bf16.msra.mxu0 0
  %804 = vmatprep.subr.bf16.mxu0 0
  %805 = vmatpush1.bf16.msra.mxu0 0
  %806 = vmatprep.subr.bf16.mxu0 0
  %807 = vmatpush1.bf16.msra.mxu0 0
  %808 = vmatprep.subr.bf16.mxu0 0
  %809 = vmatpush1.bf16.msra.mxu0 0
  %810 = vmatprep.subr.bf16.mxu0 0
  %811 = vmatpush1.bf16.msra.mxu0 0
  %812 = vmatprep.mubr.bf16.mxu0 %v778
  %813 = vmatmul.mubr.bf16.gmra.mrb[0].mxu0 %v711
  %v814 = vpop.f32.mrb[0].mxu0
  %v815 = vadd.f32 0.0, %v814
  %v816 = vpop.f32.mrb[0].mxu0
  %v817 = vpop.f32.mrb[0].mxu0
  %v818 = vadd.f32 0.0, %v817
  %v819 = vpop.f32.mrb[0].mxu0
  %820 = vdwg.mxu0
  %v822 = vsel %vm51, %v702, 0
  %824 = vmatprep.subr.bf16.mxu0 0
  %825 = vmatpush1.bf16.msra.mxu0 %v759
  %826 = vmatprep.subr.bf16.mxu0 0
  %827 = vmatpush1.bf16.msra.mxu0 %v760
  %828 = vmatprep.subr.bf16.mxu0 0
  %829 = vmatpush1.bf16.msra.mxu0 %v761
  %830 = vmatprep.subr.bf16.mxu0 0
  %831 = vmatpush1.bf16.msra.mxu0 %v762
  %832 = vmatprep.subr.bf16.mxu0 0
  %833 = vmatpush1.bf16.msra.mxu0 %v763
  %834 = vmatprep.subr.bf16.mxu0 0
  %835 = vmatpush1.bf16.msra.mxu0 %v764
  %836 = vmatprep.subr.bf16.mxu0 0
  %837 = vmatpush1.bf16.msra.mxu0 %v765
  %838 = vmatprep.subr.bf16.mxu0 0
  %839 = vmatpush1.bf16.msra.mxu0 %v766
  %840 = vmatprep.subr.bf16.mxu0 0
  %841 = vmatpush1.bf16.msra.mxu0 %v767
  %842 = vmatprep.subr.bf16.mxu0 0
  %843 = vmatpush1.bf16.msra.mxu0 0
  %844 = vmatprep.subr.bf16.mxu0 0
  %845 = vmatpush1.bf16.msra.mxu0 0
  %846 = vmatprep.subr.bf16.mxu0 0
  %847 = vmatpush1.bf16.msra.mxu0 0
  %848 = vmatprep.subr.bf16.mxu0 0
  %849 = vmatpush1.bf16.msra.mxu0 0
  %850 = vmatprep.subr.bf16.mxu0 0
  %851 = vmatpush1.bf16.msra.mxu0 0
  %852 = vmatprep.subr.bf16.mxu0 0
  %853 = vmatpush1.bf16.msra.mxu0 0
  %854 = vmatprep.subr.bf16.mxu0 0
  %855 = vmatpush1.bf16.msra.mxu0 0
  %856 = vmatprep.mubr.bf16.mxu0 %v822
  %857 = vmatmul.mubr.bf16.gmra.mrb[0].mxu0 %v701
  %v858 = vpop.f32.mrb[0].mxu0
  %v859 = vadd.f32 %v815, %v858
  %v860 = vpop.f32.mrb[0].mxu0
  %v861 = vpop.f32.mrb[0].mxu0
  %v862 = vadd.f32 %v818, %v861
  %v863 = vpop.f32.mrb[0].mxu0
  %864 = vdwg.mxu0
  %v866 = vsel %vm51, %v722, 0
  %868 = vmatprep.subr.bf16.mxu0 0
  %869 = vmatpush1.bf16.msra.mxu0 %v759
  %870 = vmatprep.subr.bf16.mxu0 0
  %871 = vmatpush1.bf16.msra.mxu0 %v760
  %872 = vmatprep.subr.bf16.mxu0 0
  %873 = vmatpush1.bf16.msra.mxu0 %v761
  %874 = vmatprep.subr.bf16.mxu0 0
  %875 = vmatpush1.bf16.msra.mxu0 %v762
  %876 = vmatprep.subr.bf16.mxu0 0
  %877 = vmatpush1.bf16.msra.mxu0 %v763
  %878 = vmatprep.subr.bf16.mxu0 0
  %879 = vmatpush1.bf16.msra.mxu0 %v764
  %880 = vmatprep.subr.bf16.mxu0 0
  %881 = vmatpush1.bf16.msra.mxu0 %v765
  %882 = vmatprep.subr.bf16.mxu0 0
  %883 = vmatpush1.bf16.msra.mxu0 %v766
  %884 = vmatprep.subr.bf16.mxu0 0
  %885 = vmatpush1.bf16.msra.mxu0 %v767
  %886 = vmatprep.subr.bf16.mxu0 0
  %887 = vmatpush1.bf16.msra.mxu0 0
  %888 = vmatprep.subr.bf16.mxu0 0
  %889 = vmatpush1.bf16.msra.mxu0 0
  %890 = vmatprep.subr.bf16.mxu0 0
  %891 = vmatpush1.bf16.msra.mxu0 0
  %892 = vmatprep.subr.bf16.mxu0 0
  %893 = vmatpush1.bf16.msra.mxu0 0
  %894 = vmatprep.subr.bf16.mxu0 0
  %895 = vmatpush1.bf16.msra.mxu0 0
  %896 = vmatprep.subr.bf16.mxu0 0
  %897 = vmatpush1.bf16.msra.mxu0 0
  %898 = vmatprep.subr.bf16.mxu0 0
  %899 = vmatpush1.bf16.msra.mxu0 0
  %900 = vmatprep.mubr.bf16.mxu0 %v866
  %901 = vmatmul.mubr.bf16.gmra.mrb[0].mxu0 %v721
  %v902 = vpop.f32.mrb[0].mxu0
  %v903 = vadd.f32 0.0, %v902
  %v904 = vpop.f32.mrb[0].mxu0
  %v905 = vpop.f32.mrb[0].mxu0
  %v906 = vadd.f32 0.0, %v905
  %v907 = vpop.f32.mrb[0].mxu0
  %908 = vdwg.mxu0
  %v909 = vadd.f32 %v859, %v903
  %v910 = vadd.f32 %v862, %v906
  %v911 = vadd.f32 %v909, 9e-10
  %v912 = vadd.f32 %v910, 9e-10
  %v913 = vrcp.pop %v911
  %v914 = vmul.f32 1.0, %v913
  %v915 = vrcp.pop %v912
  %v916 = vmul.f32 1.0, %v915
  %v917 = vld [vmem:[%s3] sm:$0xf]
  %v918 = vld [vmem:[%s3 + $0x4] sm:$0xf]
  %v919 = vpack.c.bf16 %v916, %v914
  %v920 = vunpack.c.l.bf16 %v919
  %v921 = vunpack.c.h.bf16 %v919
  %v922 = vsub.f32 %v914, %v920
  %v923 = vsub.f32 %v916, %v921
  %v924 = vpack.c.bf16 %v923, %v922
  %v925 = vunpack.c.l.bf16 %v924
  %v926 = vunpack.c.h.bf16 %v924
  %v927 = vsub.f32 %v922, %v925
  %v928 = vsub.f32 %v923, %v926
  %v929 = vpack.c.bf16 %v928, %v927
  %v932 = vunpack.c.l.b16 %v917
  %v933 = vunpack.c.l.b16 %v918
  %v934 = vpack.c.b16 %v933, %v932
  %v936 = vsel %vm51, %v934, 0
  %938 = vmatprep.subr.bf16.mxu0 0
  %939 = vmatpush1.bf16.msra.mxu0 %v924
  %940 = vmatprep.subr.bf16.mxu0 0
  %941 = vmatpush1.bf16.msra.mxu0 0
  %942 = vmatprep.subr.bf16.mxu0 0
  %943 = vmatpush1.bf16.msra.mxu0 0
  %944 = vmatprep.subr.bf16.mxu0 0
  %945 = vmatpush1.bf16.msra.mxu0 0
  %946 = vmatprep.subr.bf16.mxu0 0
  %947 = vmatpush1.bf16.msra.mxu0 0
  %948 = vmatprep.subr.bf16.mxu0 0
  %949 = vmatpush1.bf16.msra.mxu0 0
  %950 = vmatprep.subr.bf16.mxu0 0
  %951 = vmatpush1.bf16.msra.mxu0 0
  %952 = vmatprep.subr.bf16.mxu0 0
  %953 = vmatpush1.bf16.msra.mxu0 0
  %954 = vmatprep.subr.bf16.mxu0 0
  %955 = vmatpush1.bf16.msra.mxu0 0
  %956 = vmatprep.subr.bf16.mxu0 0
  %957 = vmatpush1.bf16.msra.mxu0 0
  %958 = vmatprep.subr.bf16.mxu0 0
  %959 = vmatpush1.bf16.msra.mxu0 0
  %960 = vmatprep.subr.bf16.mxu0 0
  %961 = vmatpush1.bf16.msra.mxu0 0
  %962 = vmatprep.subr.bf16.mxu0 0
  %963 = vmatpush1.bf16.msra.mxu0 0
  %964 = vmatprep.subr.bf16.mxu0 0
  %965 = vmatpush1.bf16.msra.mxu0 0
  %966 = vmatprep.subr.bf16.mxu0 0
  %967 = vmatpush1.bf16.msra.mxu0 0
  %968 = vmatprep.subr.bf16.mxu0 0
  %969 = vmatpush1.bf16.msra.mxu0 0
  %970 = vmatprep.mubr.bf16.mxu0 0
  %971 = vmatmul.mubr.bf16.gmra.mrb[0].mxu0 %v936
  %v972 = vpop.f32.mrb[0].mxu0
  %v973 = vadd.f32 0.0, %v972
  %v974 = vpop.f32.mrb[0].mxu0
  %v975 = vpop.f32.mrb[0].mxu0
  %v976 = vadd.f32 0.0, %v975
  %v977 = vpop.f32.mrb[0].mxu0
  %978 = vdwg.mxu0
  %979 = vmatprep.subr.bf16.mxu0 0
  %980 = vmatpush1.bf16.msra.mxu0 %v919
  %981 = vmatprep.subr.bf16.mxu0 0
  %982 = vmatpush1.bf16.msra.mxu0 0
  %983 = vmatprep.subr.bf16.mxu0 0
  %984 = vmatpush1.bf16.msra.mxu0 0
  %985 = vmatprep.subr.bf16.mxu0 0
  %986 = vmatpush1.bf16.msra.mxu0 0
  %987 = vmatprep.subr.bf16.mxu0 0
  %988 = vmatpush1.bf16.msra.mxu0 0
  %989 = vmatprep.subr.bf16.mxu0 0
  %990 = vmatpush1.bf16.msra.mxu0 0
  %991 = vmatprep.subr.bf16.mxu0 0
  %992 = vmatpush1.bf16.msra.mxu0 0
  %993 = vmatprep.subr.bf16.mxu0 0
  %994 = vmatpush1.bf16.msra.mxu0 0
  %995 = vmatprep.subr.bf16.mxu0 0
  %996 = vmatpush1.bf16.msra.mxu0 0
  %997 = vmatprep.subr.bf16.mxu0 0
  %998 = vmatpush1.bf16.msra.mxu0 0
  %999 = vmatprep.subr.bf16.mxu0 0
  %1000 = vmatpush1.bf16.msra.mxu0 0
  %1001 = vmatprep.subr.bf16.mxu0 0
  %1002 = vmatpush1.bf16.msra.mxu0 0
  %1003 = vmatprep.subr.bf16.mxu0 0
  %1004 = vmatpush1.bf16.msra.mxu0 0
  %1005 = vmatprep.subr.bf16.mxu0 0
  %1006 = vmatpush1.bf16.msra.mxu0 0
  %1007 = vmatprep.subr.bf16.mxu0 0
  %1008 = vmatpush1.bf16.msra.mxu0 0
  %1009 = vmatprep.subr.bf16.mxu0 0
  %1010 = vmatpush1.bf16.msra.mxu0 0
  %1011 = vmatprep.mubr.bf16.mxu0 0
  %1012 = vmatmul.mubr.bf16.gmra.mrb[0].mxu0 %v936
  %v1013 = vpop.f32.mrb[0].mxu0
  %v1014 = vadd.f32 %v973, %v1013
  %v1015 = vpop.f32.mrb[0].mxu0
  %v1016 = vpop.f32.mrb[0].mxu0
  %v1017 = vadd.f32 %v976, %v1016
  %v1018 = vpop.f32.mrb[0].mxu0
  %1019 = vdwg.mxu0
  %1020 = vmatprep.subr.bf16.mxu0 0
  %1021 = vmatpush1.bf16.msra.mxu0 %v929
  %1022 = vmatprep.subr.bf16.mxu0 0
  %1023 = vmatpush1.bf16.msra.mxu0 0
  %1024 = vmatprep.subr.bf16.mxu0 0
  %1025 = vmatpush1.bf16.msra.mxu0 0
  %1026 = vmatprep.subr.bf16.mxu0 0
  %1027 = vmatpush1.bf16.msra.mxu0 0
  %1028 = vmatprep.subr.bf16.mxu0 0
  %1029 = vmatpush1.bf16.msra.mxu0 0
  %1030 = vmatprep.subr.bf16.mxu0 0
  %1031 = vmatpush1.bf16.msra.mxu0 0
  %1032 = vmatprep.subr.bf16.mxu0 0
  %1033 = vmatpush1.bf16.msra.mxu0 0
  %1034 = vmatprep.subr.bf16.mxu0 0
  %1035 = vmatpush1.bf16.msra.mxu0 0
  %1036 = vmatprep.subr.bf16.mxu0 0
  %1037 = vmatpush1.bf16.msra.mxu0 0
  %1038 = vmatprep.subr.bf16.mxu0 0
  %1039 = vmatpush1.bf16.msra.mxu0 0
  %1040 = vmatprep.subr.bf16.mxu0 0
  %1041 = vmatpush1.bf16.msra.mxu0 0
  %1042 = vmatprep.subr.bf16.mxu0 0
  %1043 = vmatpush1.bf16.msra.mxu0 0
  %1044 = vmatprep.subr.bf16.mxu0 0
  %1045 = vmatpush1.bf16.msra.mxu0 0
  %1046 = vmatprep.subr.bf16.mxu0 0
  %1047 = vmatpush1.bf16.msra.mxu0 0
  %1048 = vmatprep.subr.bf16.mxu0 0
  %1049 = vmatpush1.bf16.msra.mxu0 0
  %1050 = vmatprep.subr.bf16.mxu0 0
  %1051 = vmatpush1.bf16.msra.mxu0 0
  %1052 = vmatprep.mubr.bf16.mxu0 0
  %1053 = vmatmul.mubr.bf16.gmra.mrb[0].mxu0 %v936
  %v1054 = vpop.f32.mrb[0].mxu0
  %v1055 = vadd.f32 0.0, %v1054
  %v1056 = vpop.f32.mrb[0].mxu0
  %v1057 = vpop.f32.mrb[0].mxu0
  %v1058 = vadd.f32 0.0, %v1057
  %v1059 = vpop.f32.mrb[0].mxu0
  %1060 = vdwg.mxu0
  %v1061 = vadd.f32 %v1014, %v1055
  %v1062 = vadd.f32 %v1017, %v1058
  %v1063 = vld [vmem:[%s6] sm:$0xf]
  %v1064 = vld [vmem:[%s6 + $0x4] sm:$0xf]
  %v1065 = vld [vmem:[%s6 + $0x8] sm:$0xf]
  %v1066 = vld [vmem:[%s6 + $0xc] sm:$0xf]
  %v1067 = vld [vmem:[%s6 + $0x10] sm:$0xf]
  %v1068 = vld [vmem:[%s6 + $0x14] sm:$0xf]
  %v1069 = vld [vmem:[%s6 + $0x18] sm:$0xf]
  %v1070 = vld [vmem:[%s6 + $0x1c] sm:$0xf]
  %v1071 = vld [vmem:[%s6 + $0x20] sm:$0xf]
  %v1072 = vld [vmem:[%s6 + $0x24] sm:$0xf]
  %v1073 = vld [vmem:[%s6 + $0x28] sm:$0xf]
  %v1074 = vld [vmem:[%s6 + $0x2c] sm:$0xf]
  %v1075 = vld [vmem:[%s6 + $0x30] sm:$0xf]
  %v1076 = vld [vmem:[%s6 + $0x34] sm:$0xf]
  %v1077 = vld [vmem:[%s6 + $0x38] sm:$0xf]
  %v1078 = vld [vmem:[%s6 + $0x3c] sm:$0xf]
  %v1079 = vpack.c.bf16 %v1062, %v1061
  %v1080 = vunpack.c.l.bf16 %v1079
  %v1081 = vunpack.c.h.bf16 %v1079
  %v1082 = vsub.f32 %v1061, %v1080
  %v1083 = vsub.f32 %v1062, %v1081
  %v1084 = vpack.c.bf16 %v1083, %v1082
  %v1085 = vunpack.c.l.bf16 %v1084
  %v1086 = vunpack.c.h.bf16 %v1084
  %v1087 = vsub.f32 %v1082, %v1085
  %v1088 = vsub.f32 %v1083, %v1086
  %v1089 = vpack.c.bf16 %v1088, %v1087
  %v1106 = vunpack.c.l.b16 %v1063
  %v1107 = vunpack.c.l.b16 %v1064
  %v1108 = vunpack.c.l.b16 %v1065
  %v1109 = vunpack.c.l.b16 %v1066
  %v1110 = vunpack.c.l.b16 %v1067
  %v1111 = vunpack.c.l.b16 %v1068
  %v1112 = vunpack.c.l.b16 %v1069
  %v1113 = vunpack.c.l.b16 %v1070
  %v1114 = vunpack.c.l.b16 %v1071
  %v1115 = vunpack.c.l.b16 %v1072
  %v1116 = vunpack.c.l.b16 %v1073
  %v1117 = vunpack.c.l.b16 %v1074
  %v1118 = vunpack.c.l.b16 %v1075
  %v1119 = vunpack.c.l.b16 %v1076
  %v1120 = vunpack.c.l.b16 %v1077
  %v1121 = vunpack.c.l.b16 %v1078
  %v1122 = vpack.c.b16 %v1107, %v1106
  %v1123 = vpack.c.b16 %v1109, %v1108
  %v1124 = vpack.c.b16 %v1111, %v1110
  %v1125 = vpack.c.b16 %v1113, %v1112
  %v1126 = vpack.c.b16 %v1115, %v1114
  %v1127 = vpack.c.b16 %v1117, %v1116
  %v1128 = vpack.c.b16 %v1119, %v1118
  %v1129 = vpack.c.b16 %v1121, %v1120
  %1138 = vmatprep.subr.bf16.mxu0 0
  %1139 = vmatpush1.bf16.msra.mxu0 %v1122
  %1140 = vmatprep.subr.bf16.mxu0 0
  %1141 = vmatpush1.bf16.msra.mxu0 %v1123
  %1142 = vmatprep.subr.bf16.mxu0 0
  %1143 = vmatpush1.bf16.msra.mxu0 %v1124
  %1144 = vmatprep.subr.bf16.mxu0 0
  %1145 = vmatpush1.bf16.msra.mxu0 %v1125
  %1146 = vmatprep.subr.bf16.mxu0 0
  %1147 = vmatpush1.bf16.msra.mxu0 %v1126
  %1148 = vmatprep.subr.bf16.mxu0 0
  %1149 = vmatpush1.bf16.msra.mxu0 %v1127
  %1150 = vmatprep.subr.bf16.mxu0 0
  %1151 = vmatpush1.bf16.msra.mxu0 %v1128
  %1152 = vmatprep.subr.bf16.mxu0 0
  %1153 = vmatpush1.bf16.msra.mxu0 %v1129
  %1154 = vmatprep.subr.bf16.mxu0 0
  %1155 = vmatpush1.bf16.msra.mxu0 0
  %1156 = vmatprep.subr.bf16.mxu0 0
  %1157 = vmatpush1.bf16.msra.mxu0 0
  %1158 = vmatprep.subr.bf16.mxu0 0
  %1159 = vmatpush1.bf16.msra.mxu0 0
  %1160 = vmatprep.subr.bf16.mxu0 0
  %1161 = vmatpush1.bf16.msra.mxu0 0
  %1162 = vmatprep.subr.bf16.mxu0 0
  %1163 = vmatpush1.bf16.msra.mxu0 0
  %1164 = vmatprep.subr.bf16.mxu0 0
  %1165 = vmatpush1.bf16.msra.mxu0 0
  %1166 = vmatprep.subr.bf16.mxu0 0
  %1167 = vmatpush1.bf16.msra.mxu0 0
  %1168 = vmatprep.subr.bf16.mxu0 0
  %1169 = vmatpush1.bf16.msra.mxu0 0
  %1170 = vmatprep.mubr.bf16.mxu0 0
  %1171 = vmatmul.mubr.bf16.gmra.mrb[0].mxu0 %v1084
  %v1172 = vpop.f32.mrb[0].mxu0
  %v1173 = vadd.f32 0.0, %v1172
  %v1174 = vpop.f32.mrb[0].mxu0
  %v1175 = vpop.f32.mrb[0].mxu0
  %v1176 = vadd.f32 0.0, %v1175
  %v1177 = vpop.f32.mrb[0].mxu0
  %1178 = vdwg.mxu0
  %1179 = vmatprep.subr.bf16.mxu0 0
  %1180 = vmatpush1.bf16.msra.mxu0 %v1122
  %1181 = vmatprep.subr.bf16.mxu0 0
  %1182 = vmatpush1.bf16.msra.mxu0 %v1123
  %1183 = vmatprep.subr.bf16.mxu0 0
  %1184 = vmatpush1.bf16.msra.mxu0 %v1124
  %1185 = vmatprep.subr.bf16.mxu0 0
  %1186 = vmatpush1.bf16.msra.mxu0 %v1125
  %1187 = vmatprep.subr.bf16.mxu0 0
  %1188 = vmatpush1.bf16.msra.mxu0 %v1126
  %1189 = vmatprep.subr.bf16.mxu0 0
  %1190 = vmatpush1.bf16.msra.mxu0 %v1127
  %1191 = vmatprep.subr.bf16.mxu0 0
  %1192 = vmatpush1.bf16.msra.mxu0 %v1128
  %1193 = vmatprep.subr.bf16.mxu0 0
  %1194 = vmatpush1.bf16.msra.mxu0 %v1129
  %1195 = vmatprep.subr.bf16.mxu0 0
  %1196 = vmatpush1.bf16.msra.mxu0 0
  %1197 = vmatprep.subr.bf16.mxu0 0
  %1198 = vmatpush1.bf16.msra.mxu0 0
  %1199 = vmatprep.subr.bf16.mxu0 0
  %1200 = vmatpush1.bf16.msra.mxu0 0
  %1201 = vmatprep.subr.bf16.mxu0 0
  %1202 = vmatpush1.bf16.msra.mxu0 0
  %1203 = vmatprep.subr.bf16.mxu0 0
  %1204 = vmatpush1.bf16.msra.mxu0 0
  %1205 = vmatprep.subr.bf16.mxu0 0
  %1206 = vmatpush1.bf16.msra.mxu0 0
  %1207 = vmatprep.subr.bf16.mxu0 0
  %1208 = vmatpush1.bf16.msra.mxu0 0
  %1209 = vmatprep.subr.bf16.mxu0 0
  %1210 = vmatpush1.bf16.msra.mxu0 0
  %1211 = vmatprep.mubr.bf16.mxu0 0
  %1212 = vmatmul.mubr.bf16.gmra.mrb[0].mxu0 %v1079
  %v1213 = vpop.f32.mrb[0].mxu0
  %v1214 = vadd.f32 %v1173, %v1213
  %v1215 = vpop.f32.mrb[0].mxu0
  %v1216 = vpop.f32.mrb[0].mxu0
  %v1217 = vadd.f32 %v1176, %v1216
  %v1218 = vpop.f32.mrb[0].mxu0
  %1219 = vdwg.mxu0
  %1220 = vmatprep.subr.bf16.mxu0 0
  %1221 = vmatpush1.bf16.msra.mxu0 %v1122
  %1222 = vmatprep.subr.bf16.mxu0 0
  %1223 = vmatpush1.bf16.msra.mxu0 %v1123
  %1224 = vmatprep.subr.bf16.mxu0 0
  %1225 = vmatpush1.bf16.msra.mxu0 %v1124
  %1226 = vmatprep.subr.bf16.mxu0 0
  %1227 = vmatpush1.bf16.msra.mxu0 %v1125
  %1228 = vmatprep.subr.bf16.mxu0 0
  %1229 = vmatpush1.bf16.msra.mxu0 %v1126
  %1230 = vmatprep.subr.bf16.mxu0 0
  %1231 = vmatpush1.bf16.msra.mxu0 %v1127
  %1232 = vmatprep.subr.bf16.mxu0 0
  %1233 = vmatpush1.bf16.msra.mxu0 %v1128
  %1234 = vmatprep.subr.bf16.mxu0 0
  %1235 = vmatpush1.bf16.msra.mxu0 %v1129
  %1236 = vmatprep.subr.bf16.mxu0 0
  %1237 = vmatpush1.bf16.msra.mxu0 0
  %1238 = vmatprep.subr.bf16.mxu0 0
  %1239 = vmatpush1.bf16.msra.mxu0 0
  %1240 = vmatprep.subr.bf16.mxu0 0
  %1241 = vmatpush1.bf16.msra.mxu0 0
  %1242 = vmatprep.subr.bf16.mxu0 0
  %1243 = vmatpush1.bf16.msra.mxu0 0
  %1244 = vmatprep.subr.bf16.mxu0 0
  %1245 = vmatpush1.bf16.msra.mxu0 0
  %1246 = vmatprep.subr.bf16.mxu0 0
  %1247 = vmatpush1.bf16.msra.mxu0 0
  %1248 = vmatprep.subr.bf16.mxu0 0
  %1249 = vmatpush1.bf16.msra.mxu0 0
  %1250 = vmatprep.subr.bf16.mxu0 0
  %1251 = vmatpush1.bf16.msra.mxu0 0
  %1252 = vmatprep.mubr.bf16.mxu0 0
  %1253 = vmatmul.mubr.bf16.gmra.mrb[0].mxu0 %v1089
  %v1254 = vpop.f32.mrb[0].mxu0
  %v1255 = vadd.f32 0.0, %v1254
  %v1256 = vpop.f32.mrb[0].mxu0
  %v1257 = vpop.f32.mrb[0].mxu0
  %v1258 = vadd.f32 0.0, %v1257
  %v1259 = vpop.f32.mrb[0].mxu0
  %1260 = vdwg.mxu0
  %v1261 = vadd.f32 %v1214, %v1255
  %v1262 = vadd.f32 %v1217, %v1258
  %v1263 = vmul.f32 %v1261, 0.04
  %v1264 = vmul.f32 %v1262, 0.04
  %1265 = vst [vmem:[%s7] sm:$0xff] %v1263
  %1266 = vst [vmem:[%s7 + $0x8] sm:$0xff] %v1264
  // Predicated region
  $region30: #{hill_pallas.1} parent=0 // pred_check
    _
  $region31: #{hill_pallas.1} parent=0 // pred_check_branch
    %1268 = sbr.rel (0) target = $region33
  $region32: #{hill_pallas.1} parent=0 // pred_region
    _
  $region33: #{hill_pallas.1} parent=0 // pred_fallthru
    _
  // Predicated region
  $region34: #{hill_pallas.1} parent=0 // pred_check
    _
  $region35: #{hill_pallas.1} parent=0 // pred_check_branch
    %1270 = sbr.rel (0) target = $region37
  $region36: #{hill_pallas.1} parent=0 // pred_region
    _
  $region37: #{hill_pallas.1} parent=0 // pred_fallthru
    _

</llo_original>
